<compile_context>
chip_gen: v6e
topology: v6e:2x2x1
jax: 0.10.0
libtpu: 0.0.40
codegen_flags: <defaults>
</compile_context>

<pallas_src>
import numpy as np
import jax
import jax.numpy as jnp
from jax.experimental import pallas as pl
from jax.experimental.pallas import tpu as pltpu

# ----------------------------- configuration -------------------------------
B, T = 2, 16                 # batch, episode length  -> R = 32 rows
NA = 4                       # n_agents
NACT = 5                     # n_actions
AD = NA * NACT               # action_dim = 20
NQ = 8                       # n_quantiles (== n_target_quantiles)
SD = 32                      # state_dim
UD = 8                       # unit_dim  (UD * NA <= SD)
NH = 4                       # attention heads
ED = 32                      # mixing_embed_dim
NK = 4                       # num_kernel (DMAQ_SI_Weight)
ATTEND_REG_COEF = 0.001

R = B * T
assert UD * NA <= SD
INV_SQRT_E = float(1.0 / np.sqrt(ED))

# packed row-input layout: [agent_qs | states | actions | max_q_i]
XO_AQ = 0
XO_S = NA * NQ                       # 32
XO_ACT = XO_S + SD                   # 64
XO_MAXQ = XO_ACT + AD                # 84
XW = XO_MAXQ + NA                    # 88

# packed fused-weight column layout
NHAE = NH * NA * ED                  # 512
C_SEL = 0                            # selector, duplicated per agent
C_KEY = C_SEL + NHAE                 # 512  block-diagonal per-agent keys
C_V1 = C_KEY + NHAE                  # 1024 V(s) layer 1
C_DK = C_V1 + ED                     # 1056 DMAQ |key|, duplicated per agent
C_AG = C_DK + NK * NA                # 1072 DMAQ agent gate
C_AC = C_AG + NK * NA                # 1088 DMAQ state+action gate
C_QE = C_AC + NK * NA                # 1104 per-agent quantile mean
C_QS = C_QE + NA                     # 1108 sum of per-agent means
C_QM = C_QS + 1                      # 1109 quantile mixture
NW = C_QM + NQ                       # 1117
NW_PAD = ((NW + 127) // 128) * 128   # 1152 -> unmasked MXU passes / lane-dense output of matmul

NOUT = NQ + 2 * NH                   # 16: [q_joint | sum_a logits^2 per head | entropy per head]


# ------------------------------ Pallas kernel ------------------------------
def dplex_kernel(x_ref, w_ref, b_ref, sseg_ref, hsum_ref, wv2_ref, bv2_ref, out_ref):
    x = x_ref[...]                                              # (R, XW)

    # --- one fused MXU matmul for every linear map on the row inputs ---------
    pre = jnp.dot(x, w_ref[...], preferred_element_type=jnp.float32) + b_ref[...]   # (R, NW_PAD)

    sel_exp = pre[:, C_SEL:C_SEL + NHAE]                        # (R, 512) selector (dup per agent)
    keys    = pre[:, C_KEY:C_KEY + NHAE]                        # (R, 512) per-(head,agent) keys
    h1_pre  = pre[:, C_V1:C_V1 + ED]                            # (R, ED)  V(s) layer-1 pre-act
    dk_pre  = pre[:, C_DK:C_DK + NK * NA]                       # (R, NK*NA)
    ag_pre  = pre[:, C_AG:C_AG + NK * NA]                       # (R, NK*NA)
    ac_pre  = pre[:, C_AC:C_AC + NK * NA]                       # (R, NK*NA)
    qv_exp  = pre[:, C_QE:C_QE + NA]                            # (R, NA)  mean over quantiles
    q_sum   = pre[:, C_QS:C_QS + 1]                             # (R, 1)
    q_mix   = pre[:, C_QM:C_QM + NQ]                            # (R, NQ)
    maxq    = x[:, XO_MAXQ:XO_MAXQ + NA]                        # (R, NA)

    # --- Qatten attention logits: product + one segment-sum matmul -----------
    logits = jnp.dot(sel_exp * keys, sseg_ref[...],
                     preferred_element_type=jnp.float32)        # (R, NA*NH) in [agent][head] order
    scaled = logits * INV_SQRT_E

    # softmax over agents via NA lane-slices of width NH (elementwise, no XLU reduces)
    sc = [scaled[:, a * NH:(a + 1) * NH] for a in range(NA)]
    lg = [logits[:, a * NH:(a + 1) * NH] for a in range(NA)]
    m = sc[0]
    for a in range(1, NA):
        m = jnp.maximum(m, sc[a])
    es = [jnp.exp(sc[a] - m) for a in range(NA)]
    denom = es[0]
    for a in range(1, NA):
        denom = denom + es[a]
    inv_d = pl.reciprocal(denom, approx=True)                   # EUP slot, off the VPU path
    probs = [es[a] * inv_d for a in range(NA)]                  # each (R, NH)

    logsq = lg[0] * lg[0]
    ent = -probs[0] * jnp.log(probs[0] + 1e-8)
    for a in range(1, NA):
        logsq = logsq + lg[a] * lg[a]                           # (R, NH): sum_a logits^2
        ent = ent - probs[a] * jnp.log(probs[a] + 1e-8)         # (R, NH): per-head entropy

    probs_cat = jnp.concatenate(probs, axis=1)                  # (R, NA*NH)
    w_final = jnp.dot(probs_cat, hsum_ref[...],
                      preferred_element_type=jnp.float32) + 1e-10   # (R, NA): sum over heads

    # --- V(s) bias (cancels in adv_q; kept for op-for-op fidelity with forward_qplex)
    h1 = jnp.maximum(h1_pre, 0.0)
    v = jnp.dot(h1, wv2_ref[...], preferred_element_type=jnp.float32) + bv2_ref[...]  # (R, 1)
    v_b = v * (1.0 / NA)

    adv_q = (w_final * qv_exp + v_b) - (w_final * maxq + v_b)   # (R, NA)

    # --- DMAQ_SI_Weight: |key| * sigmoid gates, summed over NK kernels (pure elementwise)
    lam = (jnp.abs(dk_pre) + 1e-10) * jax.nn.sigmoid(ag_pre) * jax.nn.sigmoid(ac_pre)
    adv_w = lam[:, 0:NA]
    for k in range(1, NK):
        adv_w = adv_w + lam[:, k * NA:(k + 1) * NA]             # (R, NA)

    adv_tot = jnp.sum(adv_q * (adv_w - 1.0), axis=1, keepdims=True)   # (R, 1) == q_joint_expected
    q_joint = q_mix - q_sum + adv_tot                           # (R, NQ)

    out_ref[...] = jnp.concatenate([q_joint, logsq, ent], axis=1)     # (R, 16), single full store
    # TODO(synk): is_v=True path (returns q_joint_expected = sum(w*q + v) only) not wired in.


# --------------------------- offline weight packing --------------------------
def pack_params(p):
    """Fold all row-linear maps into one (XW, NW_PAD) slab + bias; build aux sum matrices."""
    wsel = np.asarray(p['wsel'])                          # (SD, NH*ED)
    wkey = np.asarray(p['wkey']).reshape(NH, UD, ED)

    W = np.zeros((XW, NW_PAD), np.float32)
    b = np.zeros((1, NW_PAD), np.float32)

    for h in range(NH):
        sel_h = wsel[:, h * ED:(h + 1) * ED]
        for a in range(NA):
            c = (h * NA + a) * ED
            W[XO_S:XO_S + SD, C_SEL + c:C_SEL + c + ED] = sel_h            # selector dup per agent
            W[XO_S + a * UD:XO_S + (a + 1) * UD,
              C_KEY + c:C_KEY + c + ED] = wkey[h]                          # block-diag keys

    W[XO_S:XO_S + SD, C_V1:C_V1 + ED] = np.asarray(p['wv1'])
    b[0, C_V1:C_V1 + ED] = np.asarray(p['bv1']).reshape(-1)

    wk = np.asarray(p['wk']); bk = np.asarray(p['bk']).reshape(-1)
    for k in range(NK):
        for a in range(NA):
            W[XO_S:XO_S + SD, C_DK + k * NA + a] = wk[:, k]                # DMAQ key dup per agent
            b[0, C_DK + k * NA + a] = bk[k]

    W[XO_S:XO_S + SD, C_AG:C_AG + NK * NA] = np.asarray(p['wa'])
    b[0, C_AG:C_AG + NK * NA] = np.asarray(p['ba']).reshape(-1)
    W[XO_S:XO_S + SD, C_AC:C_AC + NK * NA] = np.asarray(p['wcs'])
    W[XO_ACT:XO_ACT + AD, C_AC:C_AC + NK * NA] = np.asarray(p['wca'])
    b[0, C_AC:C_AC + NK * NA] = np.asarray(p['bc']).reshape(-1)

    for a in range(NA):
        W[XO_AQ + a * NQ:XO_AQ + (a + 1) * NQ, C_QE + a] = 1.0 / NQ        # per-agent quantile mean
    W[XO_AQ:XO_AQ + NA * NQ, C_QS] = 1.0 / NQ                              # q_vals_sum
    for a in range(NA):
        for q in range(NQ):
            W[XO_AQ + a * NQ + q, C_QM + q] = 1.0                          # q_mixture

    # segment-sum over ED: product columns (h,a,e) -> logits in [agent][head] order
    S = np.zeros((NHAE, NA * NH), np.float32)
    for h in range(NH):
        for a in range(NA):
            S[(h * NA + a) * ED:(h * NA + a + 1) * ED, a * NH + h] = 1.0
    # sum over heads: probs [agent][head] -> w_final per agent
    H = np.zeros((NA * NH, NA), np.float32)
    for a in range(NA):
        H[a * NH:(a + 1) * NH, a] = 1.0

    return dict(W=jnp.asarray(W), b=jnp.asarray(b), S=jnp.asarray(S), H=jnp.asarray(H),
                wv2=jnp.asarray(p['wv2'], dtype=jnp.float32),
                bv2=jnp.asarray(p['bv2'], dtype=jnp.float32))


# ------------------------------ wrapper (glue) ------------------------------
def dplex_mixer_forward(packed, agent_qs, states, actions, max_q_i):
    """Equivalent of DPLEXMixer.forward(..., target=False, is_v=False)."""
    aq = agent_qs.reshape(R, NA * NQ).astype(jnp.float32)
    s = states.reshape(R, SD).astype(jnp.float32)
    act = actions.reshape(R, AD).astype(jnp.float32)
    mq = max_q_i.reshape(R, NA).astype(jnp.float32)
    x = jnp.concatenate([aq, s, act, mq], axis=1)               # (R, XW) one lane-dense row slab

    args = (x, packed['W'], packed['b'], packed['S'], packed['H'],
            packed['wv2'], packed['bv2'])

    def full_spec(arr):
        return pl.BlockSpec(arr.shape, lambda i: (0, 0))        # whole array, single grid step

    out = pl.pallas_call(
        dplex_kernel,
        out_shape=jax.ShapeDtypeStruct((R, NOUT), jnp.float32),
        grid=(1,),                                              # whole problem fits one step
        in_specs=[full_spec(a) for a in args],
        out_specs=pl.BlockSpec((R, NOUT), lambda i: (0, 0)),
        compiler_params=pltpu.CompilerParams(dimension_semantics=("arbitrary",)),
    )(*args)

    q_joint = out[:, :NQ]
    logsq = out[:, NQ:NQ + NH]
    ent = out[:, NQ + NH:]
    attend_mag_regs = ATTEND_REG_COEF * jnp.sum(jnp.mean(logsq, axis=0) / NA)
    head_entropies = jnp.mean(ent, axis=0)                      # (NH,)
    return q_joint.reshape(B, T, 1, NQ), attend_mag_regs, head_entropies


# --------------------------- pure-JAX reference -----------------------------
def ref_forward(p, agent_qs, states, actions, max_q_i):
    hp = jax.lax.Precision.HIGHEST
    aq = agent_qs.reshape(R, NA, NQ)
    s = states.reshape(R, SD)
    act = actions.reshape(R, AD)
    mq = max_q_i.reshape(R, NA)

    q_mixture = aq.sum(1)                                # (R, NQ)
    qv_exp = aq.mean(2)                                  # (R, NA)
    q_vals_sum = qv_exp.sum(1, keepdims=True)            # (R, 1)

    sel = jnp.dot(s, p['wsel'], precision=hp).reshape(R, NH, ED)
    us = s[:, :NA * UD].reshape(R, NA, UD)
    wkey = p['wkey'].reshape(NH, UD, ED)
    keys = jnp.einsum('rau,hue->rhae', us, wkey, precision=hp)
    logits = jnp.einsum('rhe,rhae->rha', sel, keys, precision=hp)     # (R, NH, NA)
    probs = jax.nn.softmax(logits / np.sqrt(ED), axis=-1)
    w_final = probs.sum(1) + 1e-10

    h1 = jax.nn.relu(jnp.dot(s, p['wv1'], precision=hp) + p['bv1'])
    v = jnp.dot(h1, p['wv2'], precision=hp) + p['bv2']
    v_b = v / NA

    adv_q = (w_final * qv_exp + v_b) - (w_final * mq + v_b)

    key_all = jnp.abs(jnp.dot(s, p['wk'], precision=hp) + p['bk']) + 1e-10
    ag = jax.nn.sigmoid(jnp.dot(s, p['wa'], precision=hp) + p['ba']).reshape(R, NK, NA)
    ac = jax.nn.sigmoid(jnp.dot(s, p['wcs'], precision=hp)
                        + jnp.dot(act, p['wca'], precision=hp) + p['bc']).reshape(R, NK, NA)
    adv_w = (key_all[:, :, None] * ag * ac).sum(1)
    adv_tot = (adv_q * (adv_w - 1.0)).sum(1, keepdims=True)

    q_joint = q_mixture - q_vals_sum + adv_tot
    attend_mag_regs = ATTEND_REG_COEF * jnp.sum(jnp.mean(logits ** 2, axis=(0, 2)))
    head_entropies = -jnp.mean(jnp.sum(probs * jnp.log(probs + 1e-8), axis=2), axis=0)
    return q_joint.reshape(B, T, 1, NQ), attend_mag_regs, head_entropies


# ------------------------------ params / main -------------------------------
def init_params(key):
    ks = jax.random.split(key, 13)
    w = lambda k, shape, sc=0.1: sc * jax.random.normal(k, shape, dtype=jnp.float32)
    return dict(
        wsel=w(ks[0], (SD, NH * ED)),          # per-head selector weights, concatenated
        wkey=w(ks[1], (NH * UD, ED)),          # per-head key weights, stacked along rows
        wv1=w(ks[2], (SD, ED)), bv1=w(ks[3], (1, ED)),
        wv2=w(ks[4], (ED, 1)), bv2=w(ks[5], (1, 1)),
        wk=w(ks[6], (SD, NK)), bk=w(ks[7], (1, NK)),
        wa=w(ks[8], (SD, NK * NA)), ba=w(ks[9], (1, NK * NA)),
        wcs=w(ks[10], (SD, NK * NA)), wca=w(ks[11], (AD, NK * NA)),
        bc=w(ks[12], (1, NK * NA)),
    )


if __name__ == "__main__":
    root = jax.random.PRNGKey(0)
    kp, k1, k2, k3, k4 = jax.random.split(root, 5)
    params = init_params(kp)
    packed = pack_params(params)

    agent_qs = jax.random.normal(k1, (B, T, NA, NQ), dtype=jnp.float32)
    states = jax.random.normal(k2, (B, T, SD), dtype=jnp.float32)
    act_idx = jax.random.randint(k3, (B, T, NA), 0, NACT)
    actions = jax.nn.one_hot(act_idx, NACT, dtype=jnp.float32)          # (B, T, NA, NACT)
    max_q_i = jax.random.normal(k4, (B, T, NA), dtype=jnp.float32)

    q_joint, mag, ents = dplex_mixer_forward(packed, agent_qs, states, actions, max_q_i)
    jax.block_until_ready(q_joint)

    q_ref, mag_ref, ents_ref = ref_forward(params, agent_qs, states, actions, max_q_i)
    np.testing.assert_allclose(np.asarray(q_joint), np.asarray(q_ref), rtol=2e-3, atol=2e-3)
    np.testing.assert_allclose(np.asarray(mag), np.asarray(mag_ref), rtol=2e-3, atol=2e-3)
    np.testing.assert_allclose(np.asarray(ents), np.asarray(ents_ref), rtol=2e-3, atol=2e-3)

    assert q_joint.shape == (B, T, 1, NQ)
    print("KERNEL_OK")
</pallas_src>

<mosaic_0001>
module attributes {stable_mosaic.version = 11 : i64} {
  func.func @dplex_kernel(%arg0: i32, %arg1: memref<32x88xf32, #tpu.memory_space<vmem>>, %arg2: memref<88x1152xf32, #tpu.memory_space<vmem>>, %arg3: memref<1x1152xf32, #tpu.memory_space<vmem>>, %arg4: memref<512x16xf32, #tpu.memory_space<vmem>>, %arg5: memref<16x4xf32, #tpu.memory_space<vmem>>, %arg6: memref<32x1xf32, #tpu.memory_space<vmem>>, %arg7: memref<1x1xf32, #tpu.memory_space<vmem>>, %arg8: memref<32x16xf32, #tpu.memory_space<vmem>>) attributes {dimension_semantics = [#tpu.dimension_semantics<arbitrary>], iteration_bounds = array<i64: 1>, scalar_prefetch = 0 : i64, scratch_operands = 0 : i64, tpu.core_type = #tpu.core_type<tc>, window_params = [{pipeline_mode = #tpu.pipeline_mode<synchronous>, transform_indices = @transform_0, window_bounds = array<i64: 32, 88>}, {pipeline_mode = #tpu.pipeline_mode<synchronous>, transform_indices = @transform_1, window_bounds = array<i64: 88, 1152>}, {pipeline_mode = #tpu.pipeline_mode<synchronous>, transform_indices = @transform_2, window_bounds = array<i64: 1, 1152>}, {pipeline_mode = #tpu.pipeline_mode<synchronous>, transform_indices = @transform_3, window_bounds = array<i64: 512, 16>}, {pipeline_mode = #tpu.pipeline_mode<synchronous>, transform_indices = @transform_4, window_bounds = array<i64: 16, 4>}, {pipeline_mode = #tpu.pipeline_mode<synchronous>, transform_indices = @transform_5, window_bounds = array<i64: 32, 1>}, {pipeline_mode = #tpu.pipeline_mode<synchronous>, transform_indices = @transform_6, window_bounds = array<i64: 1, 1>}, {pipeline_mode = #tpu.pipeline_mode<synchronous>, transform_indices = @transform_7, window_bounds = array<i64: 32, 16>}]} {
    %c0 = arith.constant 0 : index
    %c0_0 = arith.constant 0 : index
    %0 = vector.load %arg1[%c0, %c0_0] : memref<32x88xf32, #tpu.memory_space<vmem>>, vector<32x88xf32>
    %c0_1 = arith.constant 0 : index
    %c0_2 = arith.constant 0 : index
    %1 = vector.load %arg2[%c0_1, %c0_2] : memref<88x1152xf32, #tpu.memory_space<vmem>>, vector<88x1152xf32>
    %cst = arith.constant dense<0.000000e+00> : vector<32x1152xf32>
    %2 = tpu.matmul %0, %1, %cst {dimension_numbers = #tpu.dot_dimension_numbers<[1], [0], [0], [1], [0, 0, 1, 1], [], []>} : vector<32x88xf32>, vector<88x1152xf32>, vector<32x1152xf32> -> vector<32x1152xf32>
    %c0_3 = arith.constant 0 : index
    %c0_4 = arith.constant 0 : index
    %3 = vector.load %arg3[%c0_3, %c0_4] : memref<1x1152xf32, #tpu.memory_space<vmem>>, vector<1x1152xf32>
    %4 = vector.broadcast %3 : vector<1x1152xf32> to vector<32x1152xf32>
    %5 = arith.addf %2, %4 : vector<32x1152xf32>
    %6 = vector.extract_strided_slice %5 {offsets = [0, 0], sizes = [32, 512], strides = [1, 1]} : vector<32x1152xf32> to vector<32x512xf32>
    %7 = vector.extract_strided_slice %5 {offsets = [0, 512], sizes = [32, 512], strides = [1, 1]} : vector<32x1152xf32> to vector<32x512xf32>
    %8 = vector.extract_strided_slice %5 {offsets = [0, 1024], sizes = [32, 32], strides = [1, 1]} : vector<32x1152xf32> to vector<32x32xf32>
    %9 = vector.extract_strided_slice %5 {offsets = [0, 1056], sizes = [32, 16], strides = [1, 1]} : vector<32x1152xf32> to vector<32x16xf32>
    %10 = vector.extract_strided_slice %5 {offsets = [0, 1072], sizes = [32, 16], strides = [1, 1]} : vector<32x1152xf32> to vector<32x16xf32>
    %11 = vector.extract_strided_slice %5 {offsets = [0, 1088], sizes = [32, 16], strides = [1, 1]} : vector<32x1152xf32> to vector<32x16xf32>
    %12 = vector.extract_strided_slice %5 {offsets = [0, 1104], sizes = [32, 4], strides = [1, 1]} : vector<32x1152xf32> to vector<32x4xf32>
    %13 = vector.extract_strided_slice %5 {offsets = [0, 1108], sizes = [32, 1], strides = [1, 1]} : vector<32x1152xf32> to vector<32x1xf32>
    %14 = vector.extract_strided_slice %5 {offsets = [0, 1109], sizes = [32, 8], strides = [1, 1]} : vector<32x1152xf32> to vector<32x8xf32>
    %15 = vector.extract_strided_slice %0 {offsets = [0, 84], sizes = [32, 4], strides = [1, 1]} : vector<32x88xf32> to vector<32x4xf32>
    %16 = arith.mulf %6, %7 : vector<32x512xf32>
    %c0_5 = arith.constant 0 : index
    %c0_6 = arith.constant 0 : index
    %17 = vector.load %arg4[%c0_5, %c0_6] : memref<512x16xf32, #tpu.memory_space<vmem>>, vector<512x16xf32>
    %cst_7 = arith.constant dense<0.000000e+00> : vector<32x16xf32>
    %18 = tpu.matmul %16, %17, %cst_7 {dimension_numbers = #tpu.dot_dimension_numbers<[1], [0], [0], [1], [0, 0, 1, 1], [], []>} : vector<32x512xf32>, vector<512x16xf32>, vector<32x16xf32> -> vector<32x16xf32>
    %cst_8 = arith.constant 0.176776692 : f32
    %19 = vector.broadcast %cst_8 : f32 to vector<32x16xf32>
    %20 = arith.mulf %18, %19 : vector<32x16xf32>
    %21 = vector.extract_strided_slice %20 {offsets = [0, 0], sizes = [32, 4], strides = [1, 1]} : vector<32x16xf32> to vector<32x4xf32>
    %22 = vector.extract_strided_slice %20 {offsets = [0, 4], sizes = [32, 4], strides = [1, 1]} : vector<32x16xf32> to vector<32x4xf32>
    %23 = vector.extract_strided_slice %20 {offsets = [0, 8], sizes = [32, 4], strides = [1, 1]} : vector<32x16xf32> to vector<32x4xf32>
    %24 = vector.extract_strided_slice %20 {offsets = [0, 12], sizes = [32, 4], strides = [1, 1]} : vector<32x16xf32> to vector<32x4xf32>
    %25 = vector.extract_strided_slice %18 {offsets = [0, 0], sizes = [32, 4], strides = [1, 1]} : vector<32x16xf32> to vector<32x4xf32>
    %26 = vector.extract_strided_slice %18 {offsets = [0, 4], sizes = [32, 4], strides = [1, 1]} : vector<32x16xf32> to vector<32x4xf32>
    %27 = vector.extract_strided_slice %18 {offsets = [0, 8], sizes = [32, 4], strides = [1, 1]} : vector<32x16xf32> to vector<32x4xf32>
    %28 = vector.extract_strided_slice %18 {offsets = [0, 12], sizes = [32, 4], strides = [1, 1]} : vector<32x16xf32> to vector<32x4xf32>
    %29 = arith.maximumf %21, %22 : vector<32x4xf32>
    %30 = arith.maximumf %29, %23 : vector<32x4xf32>
    %31 = arith.maximumf %30, %24 : vector<32x4xf32>
    %32 = arith.subf %21, %31 : vector<32x4xf32>
    %33 = math.exp %32 : vector<32x4xf32>
    %34 = arith.subf %22, %31 : vector<32x4xf32>
    %35 = math.exp %34 : vector<32x4xf32>
    %36 = arith.subf %23, %31 : vector<32x4xf32>
    %37 = math.exp %36 : vector<32x4xf32>
    %38 = arith.subf %24, %31 : vector<32x4xf32>
    %39 = math.exp %38 : vector<32x4xf32>
    %40 = arith.addf %33, %35 : vector<32x4xf32>
    %41 = arith.addf %40, %37 : vector<32x4xf32>
    %42 = arith.addf %41, %39 : vector<32x4xf32>
    %43 = tpu.reciprocal %42 {approx = true} : vector<32x4xf32> -> vector<32x4xf32>
    %44 = arith.mulf %33, %43 : vector<32x4xf32>
    %45 = arith.mulf %35, %43 : vector<32x4xf32>
    %46 = arith.mulf %37, %43 : vector<32x4xf32>
    %47 = arith.mulf %39, %43 : vector<32x4xf32>
    %48 = arith.mulf %25, %25 : vector<32x4xf32>
    %cst_9 = arith.constant 0.000000e+00 : f32
    %49 = vector.broadcast %cst_9 : f32 to vector<32x4xf32>
    %50 = arith.subf %49, %44 : vector<32x4xf32>
    %cst_10 = arith.constant 9.99999993E-9 : f32
    %51 = vector.broadcast %cst_10 : f32 to vector<32x4xf32>
    %52 = arith.addf %44, %51 : vector<32x4xf32>
    %53 = math.log %52 : vector<32x4xf32>
    %54 = arith.mulf %50, %53 : vector<32x4xf32>
    %55 = arith.mulf %26, %26 : vector<32x4xf32>
    %56 = arith.addf %48, %55 : vector<32x4xf32>
    %cst_11 = arith.constant 9.99999993E-9 : f32
    %57 = vector.broadcast %cst_11 : f32 to vector<32x4xf32>
    %58 = arith.addf %45, %57 : vector<32x4xf32>
    %59 = math.log %58 : vector<32x4xf32>
    %60 = arith.mulf %45, %59 : vector<32x4xf32>
    %61 = arith.subf %54, %60 : vector<32x4xf32>
    %62 = arith.mulf %27, %27 : vector<32x4xf32>
    %63 = arith.addf %56, %62 : vector<32x4xf32>
    %cst_12 = arith.constant 9.99999993E-9 : f32
    %64 = vector.broadcast %cst_12 : f32 to vector<32x4xf32>
    %65 = arith.addf %46, %64 : vector<32x4xf32>
    %66 = math.log %65 : vector<32x4xf32>
    %67 = arith.mulf %46, %66 : vector<32x4xf32>
    %68 = arith.subf %61, %67 : vector<32x4xf32>
    %69 = arith.mulf %28, %28 : vector<32x4xf32>
    %70 = arith.addf %63, %69 : vector<32x4xf32>
    %cst_13 = arith.constant 9.99999993E-9 : f32
    %71 = vector.broadcast %cst_13 : f32 to vector<32x4xf32>
    %72 = arith.addf %47, %71 : vector<32x4xf32>
    %73 = math.log %72 : vector<32x4xf32>
    %74 = arith.mulf %47, %73 : vector<32x4xf32>
    %75 = arith.subf %68, %74 : vector<32x4xf32>
    %76 = tpu.concatenate %44, %45, %46, %47 in 1 : vector<32x4xf32>, vector<32x4xf32>, vector<32x4xf32>, vector<32x4xf32> -> vector<32x16xf32>
    %c0_14 = arith.constant 0 : index
    %c0_15 = arith.constant 0 : index
    %77 = vector.load %arg5[%c0_14, %c0_15] : memref<16x4xf32, #tpu.memory_space<vmem>>, vector<16x4xf32>
    %cst_16 = arith.constant dense<0.000000e+00> : vector<32x4xf32>
    %78 = tpu.matmul %76, %77, %cst_16 {dimension_numbers = #tpu.dot_dimension_numbers<[1], [0], [0], [1], [0, 0, 1, 1], [], []>} : vector<32x16xf32>, vector<16x4xf32>, vector<32x4xf32> -> vector<32x4xf32>
    %cst_17 = arith.constant 1.000000e-10 : f32
    %79 = vector.broadcast %cst_17 : f32 to vector<32x4xf32>
    %80 = arith.addf %78, %79 : vector<32x4xf32>
    %cst_18 = arith.constant 0.000000e+00 : f32
    %81 = vector.broadcast %cst_18 : f32 to vector<32x32xf32>
    %82 = arith.maximumf %8, %81 : vector<32x32xf32>
    %c0_19 = arith.constant 0 : index
    %c0_20 = arith.constant 0 : index
    %83 = vector.load %arg6[%c0_19, %c0_20] : memref<32x1xf32, #tpu.memory_space<vmem>>, vector<32x1xf32>
    %cst_21 = arith.constant dense<0.000000e+00> : vector<32x1xf32>
    %84 = tpu.matmul %82, %83, %cst_21 {dimension_numbers = #tpu.dot_dimension_numbers<[1], [0], [0], [1], [0, 0, 1, 1], [], []>} : vector<32x32xf32>, vector<32x1xf32>, vector<32x1xf32> -> vector<32x1xf32>
    %c0_22 = arith.constant 0 : index
    %c0_23 = arith.constant 0 : index
    %85 = vector.load %arg7[%c0_22, %c0_23] : memref<1x1xf32, #tpu.memory_space<vmem>>, vector<1x1xf32>
    %86 = vector.broadcast %85 : vector<1x1xf32> to vector<32x1xf32>
    %87 = arith.addf %84, %86 : vector<32x1xf32>
    %cst_24 = arith.constant 2.500000e-01 : f32
    %88 = vector.broadcast %cst_24 : f32 to vector<32x1xf32>
    %89 = arith.mulf %87, %88 : vector<32x1xf32>
    %90 = arith.mulf %80, %12 : vector<32x4xf32>
    %91 = vector.broadcast %89 : vector<32x1xf32> to vector<32x4xf32>
    %92 = arith.addf %90, %91 : vector<32x4xf32>
    %93 = arith.mulf %80, %15 : vector<32x4xf32>
    %94 = vector.broadcast %89 : vector<32x1xf32> to vector<32x4xf32>
    %95 = arith.addf %93, %94 : vector<32x4xf32>
    %96 = arith.subf %92, %95 : vector<32x4xf32>
    %97 = math.absf %9 : vector<32x16xf32>
    %cst_25 = arith.constant 1.000000e-10 : f32
    %98 = vector.broadcast %cst_25 : f32 to vector<32x16xf32>
    %99 = arith.addf %97, %98 : vector<32x16xf32>
    %100 = arith.negf %10 : vector<32x16xf32>
    %101 = math.exp %100 : vector<32x16xf32>
    %cst_26 = arith.constant 1.000000e+00 : f32
    %102 = vector.broadcast %cst_26 : f32 to vector<32x16xf32>
    %103 = arith.addf %102, %101 : vector<32x16xf32>
    %104 = arith.divf %102, %103 : vector<32x16xf32>
    %105 = arith.mulf %99, %104 : vector<32x16xf32>
    %106 = arith.negf %11 : vector<32x16xf32>
    %107 = math.exp %106 : vector<32x16xf32>
    %cst_27 = arith.constant 1.000000e+00 : f32
    %108 = vector.broadcast %cst_27 : f32 to vector<32x16xf32>
    %109 = arith.addf %108, %107 : vector<32x16xf32>
    %110 = arith.divf %108, %109 : vector<32x16xf32>
    %111 = arith.mulf %105, %110 : vector<32x16xf32>
    %112 = vector.extract_strided_slice %111 {offsets = [0, 0], sizes = [32, 4], strides = [1, 1]} : vector<32x16xf32> to vector<32x4xf32>
    %113 = vector.extract_strided_slice %111 {offsets = [0, 4], sizes = [32, 4], strides = [1, 1]} : vector<32x16xf32> to vector<32x4xf32>
    %114 = arith.addf %112, %113 : vector<32x4xf32>
    %115 = vector.extract_strided_slice %111 {offsets = [0, 8], sizes = [32, 4], strides = [1, 1]} : vector<32x16xf32> to vector<32x4xf32>
    %116 = arith.addf %114, %115 : vector<32x4xf32>
    %117 = vector.extract_strided_slice %111 {offsets = [0, 12], sizes = [32, 4], strides = [1, 1]} : vector<32x16xf32> to vector<32x4xf32>
    %118 = arith.addf %116, %117 : vector<32x4xf32>
    %cst_28 = arith.constant 1.000000e+00 : f32
    %119 = vector.broadcast %cst_28 : f32 to vector<32x4xf32>
    %120 = arith.subf %118, %119 : vector<32x4xf32>
    %121 = arith.mulf %96, %120 : vector<32x4xf32>
    %cst_29 = arith.constant dense<0.000000e+00> : vector<32xf32>
    %122 = vector.multi_reduction <add>, %121, %cst_29 [1] : vector<32x4xf32> to vector<32xf32>
    %123 = vector.shape_cast %122 : vector<32xf32> to vector<32x1xf32>
    %124 = vector.broadcast %13 : vector<32x1xf32> to vector<32x8xf32>
    %125 = arith.subf %14, %124 : vector<32x8xf32>
    %126 = vector.broadcast %123 : vector<32x1xf32> to vector<32x8xf32>
    %127 = arith.addf %125, %126 : vector<32x8xf32>
    %128 = tpu.concatenate %127, %70, %75 in 1 : vector<32x8xf32>, vector<32x4xf32>, vector<32x4xf32> -> vector<32x16xf32>
    %c0_30 = arith.constant 0 : index
    %c0_31 = arith.constant 0 : index
    %129 = vector.load %arg8[%c0_30, %c0_31] : memref<32x16xf32, #tpu.memory_space<vmem>>, vector<32x16xf32>
    tpu.vector_store %arg8[%c0_30, %c0_31], %128 {strides = array<i32>} : memref<32x16xf32, #tpu.memory_space<vmem>>, vector<32x16xf32>,
    return
  }
  func.func @transform_0(%arg0: i32) -> (i32, i32) {
    %c0_i32 = arith.constant 0 : i32
    %c0_i32_0 = arith.constant 0 : i32
    %c0_i32_1 = arith.constant 0 : i32
    return %c0_i32, %c0_i32_0 : i32, i32
  }
  func.func @transform_1(%arg0: i32) -> (i32, i32) {
    %c0_i32 = arith.constant 0 : i32
    %c0_i32_0 = arith.constant 0 : i32
    %c0_i32_1 = arith.constant 0 : i32
    return %c0_i32, %c0_i32_0 : i32, i32
  }
  func.func @transform_2(%arg0: i32) -> (i32, i32) {
    %c0_i32 = arith.constant 0 : i32
    %c0_i32_0 = arith.constant 0 : i32
    %c0_i32_1 = arith.constant 0 : i32
    return %c0_i32, %c0_i32_0 : i32, i32
  }
  func.func @transform_3(%arg0: i32) -> (i32, i32) {
    %c0_i32 = arith.constant 0 : i32
    %c0_i32_0 = arith.constant 0 : i32
    %c0_i32_1 = arith.constant 0 : i32
    return %c0_i32, %c0_i32_0 : i32, i32
  }
  func.func @transform_4(%arg0: i32) -> (i32, i32) {
    %c0_i32 = arith.constant 0 : i32
    %c0_i32_0 = arith.constant 0 : i32
    %c0_i32_1 = arith.constant 0 : i32
    return %c0_i32, %c0_i32_0 : i32, i32
  }
  func.func @transform_5(%arg0: i32) -> (i32, i32) {
    %c0_i32 = arith.constant 0 : i32
    %c0_i32_0 = arith.constant 0 : i32
    %c0_i32_1 = arith.constant 0 : i32
    return %c0_i32, %c0_i32_0 : i32, i32
  }
  func.func @transform_6(%arg0: i32) -> (i32, i32) {
    %c0_i32 = arith.constant 0 : i32
    %c0_i32_0 = arith.constant 0 : i32
    %c0_i32_1 = arith.constant 0 : i32
    return %c0_i32, %c0_i32_0 : i32, i32
  }
  func.func @transform_7(%arg0: i32) -> (i32, i32) {
    %c0_i32 = arith.constant 0 : i32
    %c0_i32_0 = arith.constant 0 : i32
    %c0_i32_1 = arith.constant 0 : i32
    return %c0_i32, %c0_i32_0 : i32, i32
  }
}

</mosaic_0001>

<llo_original>
// kernel: tpu_custom_call.1
$region0: #{tpu_custom_call.1}
  #allocation0 [shape = 'u32[]', space=smem, size = 0x4, offset = 0x4, fixed_abs, tag = 'smem constant byte address 0x4 - core index']
  #allocation1 [shape = 'u32[144,128]{1,0:T(1,128)}', space=vmem, size = 0x12000, scoped, tag = 'internal scratch']
  #allocation2 [shape = 'f32[1,1]{1,0:T(1,128)S(1)}', space=vmem, size = 0x200, scoped, tag = 'scoped memory for tpu_custom_call.1']
  %s0 = inlined_call_operand.vmem [shape: f32[32,88], index: 0, kind: input, shape index: {}]
  %s1 = inlined_call_operand.hbm [shape: f32[88,1152], index: 1, kind: input, shape index: {}]
  %s2 = inlined_call_operand.vmem [shape: f32[1,1152], index: 2, kind: input, shape index: {}]
  %s3 = inlined_call_operand.vmem [shape: f32[512,16], index: 3, kind: input, shape index: {}]
  %s4 = inlined_call_operand.vmem [shape: f32[16,4], index: 4, kind: input, shape index: {}]
  %s5 = inlined_call_operand.vmem [shape: f32[32,1], index: 5, kind: input, shape index: {}]
  %s6 = inlined_call_operand.<no memory space> [shape: f32[1,1], index: 6, kind: input, shape index: {}]
  %s7 = inlined_call_operand.vmem [shape: f32[32,16], index: 7, kind: output, shape index: {}]
  %s8 = sld [smem:[#allocation0]]
  $region42: #{tpu_custom_call.1} parent=0
    _
  %s10 = ssub.s32 1, %s8
  %s11 = scalar_select 0, %s10, %s8
  %v12 = vstv %s6
  %13 = vst [vmem:[#allocation2] sm:$0x1] %v12
  $region1: #{tpu_custom_call.1} parent=0
    #allocation3 [shape = 'u8[405504]{0}', space=vmem, size = 0x63000, scoped, tag = 'input window, operand 1, single buffered']
    #allocation4 [shape = 's32[1]{0}', space=sflag, size = 0x4, scoped, tag = 'scoped memory for tpu_custom_call.1']
    %14 = vsyncpa [#allocation4], 0
    // Predicated region
    $region2: #{tpu_custom_call.1} parent=1 // pred_check
      _
    $region3: #{tpu_custom_call.1} parent=1 // pred_check_branch
      %16 = sbr.rel (0) target = $region5
    $region4: #{tpu_custom_call.1} parent=1 // pred_region
      _
    $region5: #{tpu_custom_call.1} parent=1 // pred_fallthru
      _
    // Predicated region
    $region6: #{tpu_custom_call.1} parent=1 // pred_check
      _
    $region7: #{tpu_custom_call.1} parent=1 // pred_check_branch
      %18 = sbr.rel (0) target = $region9
    $region8: #{tpu_custom_call.1} parent=1 // pred_region
      %s20 = ssub.s32 12672, 12672
      %21 = vsyncadd [#allocation4], %s20
      %s22 = sshll.u32 [#allocation3], 4
      %s23 = int_to_ptr.vmem [resolvable:$true] %s22
      %28 = dma.hbm_to_vmem [thread:$0]  %s1, 12672, %s23, [#allocation4], 1152, 1152, 72
    $region9: #{tpu_custom_call.1} parent=1 // pred_fallthru
      _
    // Predicated region
    $region10: #{tpu_custom_call.1} parent=1 // pred_check
      _
    $region11: #{tpu_custom_call.1} parent=1 // pred_check_branch
      %30 = sbr.rel (0) target = $region13
    $region12: #{tpu_custom_call.1} parent=1 // pred_region
      _
    $region13: #{tpu_custom_call.1} parent=1 // pred_fallthru
      _
    // Predicated region
    $region14: #{tpu_custom_call.1} parent=1 // pred_check
      _
    $region15: #{tpu_custom_call.1} parent=1 // pred_check_branch
      %32 = sbr.rel (0) target = $region17
    $region16: #{tpu_custom_call.1} parent=1 // pred_region
      _
    $region17: #{tpu_custom_call.1} parent=1 // pred_fallthru
      _
    // Predicated region
    $region18: #{tpu_custom_call.1} parent=1 // pred_check
      _
    $region19: #{tpu_custom_call.1} parent=1 // pred_check_branch
      %34 = sbr.rel (0) target = $region21
    $region20: #{tpu_custom_call.1} parent=1 // pred_region
      _
    $region21: #{tpu_custom_call.1} parent=1 // pred_fallthru
      _
    // Predicated region
    $region22: #{tpu_custom_call.1} parent=1 // pred_check
      _
    $region23: #{tpu_custom_call.1} parent=1 // pred_check_branch
      %36 = sbr.rel (0) target = $region25
    $region24: #{tpu_custom_call.1} parent=1 // pred_region
      _
    $region25: #{tpu_custom_call.1} parent=1 // pred_fallthru
      _
    // Predicated region
    $region26: #{tpu_custom_call.1} parent=1 // pred_check
      _
    $region27: #{tpu_custom_call.1} parent=1 // pred_check_branch
      %38 = sbr.rel (0) target = $region29
    $region28: #{tpu_custom_call.1} parent=1 // pred_region
      _
    $region29: #{tpu_custom_call.1} parent=1 // pred_fallthru
      _
    // Predicated region
    $region30: #{tpu_custom_call.1} parent=1 // pred_check
      _
    $region31: #{tpu_custom_call.1} parent=1 // pred_check_branch
      %40 = sbr.rel (0) target = $region33
    $region32: #{tpu_custom_call.1} parent=1 // pred_region
      %41 = dma.done [#allocation4], 12672
    $region33: #{tpu_custom_call.1} parent=1 // pred_fallthru
      _
    %v42 = vld [vmem:[%s0] sm:$0xff]
    %v43 = vld [vmem:[%s0 + $0x8] sm:$0xff]
    %v44 = vld [vmem:[%s0 + $0x10] sm:$0xff]
    %v45 = vld [vmem:[%s0 + $0x18] sm:$0xff]
    %v46 = vld [vmem:[#allocation3] sm:$0xff]
    %v47 = vld [vmem:[#allocation3 + $0x8] sm:$0xff]
    %v48 = vld [vmem:[#allocation3 + $0x10] sm:$0xff]
    %v49 = vld [vmem:[#allocation3 + $0x18] sm:$0xff]
    %v50 = vld [vmem:[#allocation3 + $0x20] sm:$0xff]
    %v51 = vld [vmem:[#allocation3 + $0x28] sm:$0xff]
    %v52 = vld [vmem:[#allocation3 + $0x30] sm:$0xff]
    %v53 = vld [vmem:[#allocation3 + $0x38] sm:$0xff]
    %v54 = vld [vmem:[#allocation3 + $0x40] sm:$0xff]
    %v55 = vld [vmem:[#allocation3 + $0x48] sm:$0xff]
    %v56 = vld [vmem:[#allocation3 + $0x50] sm:$0xff]
    %v57 = vld [vmem:[#allocation3 + $0x58] sm:$0xff]
    %v58 = vld [vmem:[#allocation3 + $0x60] sm:$0xff]
    %v59 = vld [vmem:[#allocation3 + $0x68] sm:$0xff]
    %v60 = vld [vmem:[#allocation3 + $0x70] sm:$0xff]
    %v61 = vld [vmem:[#allocation3 + $0x78] sm:$0xff]
    %v62 = vld [vmem:[#allocation3 + $0x80] sm:$0xff]
    %v63 = vld [vmem:[#allocation3 + $0x88] sm:$0xff]
    %v64 = vld [vmem:[#allocation3 + $0x90] sm:$0xff]
    %v65 = vld [vmem:[#allocation3 + $0x98] sm:$0xff]
    %v66 = vld [vmem:[#allocation3 + $0xa0] sm:$0xff]
    %v67 = vld [vmem:[#allocation3 + $0xa8] sm:$0xff]
    %v68 = vld [vmem:[#allocation3 + $0xb0] sm:$0xff]
    %v69 = vld [vmem:[#allocation3 + $0xb8] sm:$0xff]
    %v70 = vld [vmem:[#allocation3 + $0xc0] sm:$0xff]
    %v71 = vld [vmem:[#allocation3 + $0xc8] sm:$0xff]
    %v72 = vld [vmem:[#allocation3 + $0xd0] sm:$0xff]
    %v73 = vld [vmem:[#allocation3 + $0xd8] sm:$0xff]
    %v74 = vld [vmem:[#allocation3 + $0xe0] sm:$0xff]
    %v75 = vld [vmem:[#allocation3 + $0xe8] sm:$0xff]
    %v76 = vld [vmem:[#allocation3 + $0xf0] sm:$0xff]
    %v77 = vld [vmem:[#allocation3 + $0xf8] sm:$0xff]
    %v78 = vld [vmem:[#allocation3 + $0x100] sm:$0xff]
    %v79 = vld [vmem:[#allocation3 + $0x108] sm:$0xff]
    %v80 = vld [vmem:[#allocation3 + $0x110] sm:$0xff]
    %v81 = vld [vmem:[#allocation3 + $0x118] sm:$0xff]
    %v82 = vld [vmem:[#allocation3 + $0x120] sm:$0xff]
    %v83 = vld [vmem:[#allocation3 + $0x128] sm:$0xff]
    %v84 = vld [vmem:[#allocation3 + $0x130] sm:$0xff]
    %v85 = vld [vmem:[#allocation3 + $0x138] sm:$0xff]
    %v86 = vld [vmem:[#allocation3 + $0x140] sm:$0xff]
    %v87 = vld [vmem:[#allocation3 + $0x148] sm:$0xff]
    %v88 = vld [vmem:[#allocation3 + $0x150] sm:$0xff]
    %v89 = vld [vmem:[#allocation3 + $0x158] sm:$0xff]
    %v90 = vld [vmem:[#allocation3 + $0x160] sm:$0xff]
    %v91 = vld [vmem:[#allocation3 + $0x168] sm:$0xff]
    %v92 = vld [vmem:[#allocation3 + $0x170] sm:$0xff]
    %v93 = vld [vmem:[#allocation3 + $0x178] sm:$0xff]
    %v94 = vld [vmem:[#allocation3 + $0x180] sm:$0xff]
    %v95 = vld [vmem:[#allocation3 + $0x188] sm:$0xff]
    %v96 = vld [vmem:[#allocation3 + $0x190] sm:$0xff]
    %v97 = vld [vmem:[#allocation3 + $0x198] sm:$0xff]
    %v98 = vld [vmem:[#allocation3 + $0x1a0] sm:$0xff]
    %v99 = vld [vmem:[#allocation3 + $0x1a8] sm:$0xff]
    %v100 = vld [vmem:[#allocation3 + $0x1b0] sm:$0xff]
    %v101 = vld [vmem:[#allocation3 + $0x1b8] sm:$0xff]
    %v102 = vld [vmem:[#allocation3 + $0x1c0] sm:$0xff]
    %v103 = vld [vmem:[#allocation3 + $0x1c8] sm:$0xff]
    %v104 = vld [vmem:[#allocation3 + $0x1d0] sm:$0xff]
    %v105 = vld [vmem:[#allocation3 + $0x1d8] sm:$0xff]
    %v106 = vld [vmem:[#allocation3 + $0x1e0] sm:$0xff]
    %v107 = vld [vmem:[#allocation3 + $0x1e8] sm:$0xff]
    %v108 = vld [vmem:[#allocation3 + $0x1f0] sm:$0xff]
    %v109 = vld [vmem:[#allocation3 + $0x1f8] sm:$0xff]
    %v110 = vld [vmem:[#allocation3 + $0x200] sm:$0xff]
    %v111 = vld [vmem:[#allocation3 + $0x208] sm:$0xff]
    %v112 = vld [vmem:[#allocation3 + $0x210] sm:$0xff]
    %v113 = vld [vmem:[#allocation3 + $0x218] sm:$0xff]
    %v114 = vld [vmem:[#allocation3 + $0x220] sm:$0xff]
    %v115 = vld [vmem:[#allocation3 + $0x228] sm:$0xff]
    %v116 = vld [vmem:[#allocation3 + $0x230] sm:$0xff]
    %v117 = vld [vmem:[#allocation3 + $0x238] sm:$0xff]
    %v118 = vld [vmem:[#allocation3 + $0x240] sm:$0xff]
    %v119 = vld [vmem:[#allocation3 + $0x248] sm:$0xff]
    %v120 = vld [vmem:[#allocation3 + $0x250] sm:$0xff]
    %v121 = vld [vmem:[#allocation3 + $0x258] sm:$0xff]
    %v122 = vld [vmem:[#allocation3 + $0x260] sm:$0xff]
    %v123 = vld [vmem:[#allocation3 + $0x268] sm:$0xff]
    %v124 = vld [vmem:[#allocation3 + $0x270] sm:$0xff]
    %v125 = vld [vmem:[#allocation3 + $0x278] sm:$0xff]
    %v126 = vld [vmem:[#allocation3 + $0x280] sm:$0xff]
    %v127 = vld [vmem:[#allocation3 + $0x288] sm:$0xff]
    %v128 = vld [vmem:[#allocation3 + $0x290] sm:$0xff]
    %v129 = vld [vmem:[#allocation3 + $0x298] sm:$0xff]
    %v130 = vld [vmem:[#allocation3 + $0x2a0] sm:$0xff]
    %v131 = vld [vmem:[#allocation3 + $0x2a8] sm:$0xff]
    %v132 = vld [vmem:[#allocation3 + $0x2b0] sm:$0xff]
    %v133 = vld [vmem:[#allocation3 + $0x2b8] sm:$0xff]
    %v134 = vld [vmem:[#allocation3 + $0x2c0] sm:$0xff]
    %v135 = vld [vmem:[#allocation3 + $0x2c8] sm:$0xff]
    %v136 = vld [vmem:[#allocation3 + $0x2d0] sm:$0xff]
    %v137 = vld [vmem:[#allocation3 + $0x2d8] sm:$0xff]
    %v138 = vld [vmem:[#allocation3 + $0x2e0] sm:$0xff]
    %v139 = vld [vmem:[#allocation3 + $0x2e8] sm:$0xff]
    %v140 = vld [vmem:[#allocation3 + $0x2f0] sm:$0xff]
    %v141 = vld [vmem:[#allocation3 + $0x2f8] sm:$0xff]
    %v142 = vld [vmem:[#allocation3 + $0x300] sm:$0xff]
    %v143 = vld [vmem:[#allocation3 + $0x308] sm:$0xff]
    %v144 = vld [vmem:[#allocation3 + $0x310] sm:$0xff]
    %v145 = vld [vmem:[%s2] sm:$0xff]
    %v146 = vld [vmem:[%s2 + $0x8] sm:$0x1]
    %v149 = vlaneseq
    %v150 = vshrl.u32 %v149, 7
    %v151 = vsub.s32 0, %v150
    %v152 = vrot.slane %v145, %v151
    %v153 = vlaneseq
    %v154 = vshrl.u32 %v153, 7
    %v155 = vsub.s32 1, %v154
    %v156 = vrot.slane %v145, %v155
    %v157 = vlaneseq
    %v158 = vshrl.u32 %v157, 7
    %v159 = vsub.s32 2, %v158
    %v160 = vrot.slane %v145, %v159
    %v161 = vlaneseq
    %v162 = vshrl.u32 %v161, 7
    %v163 = vsub.s32 3, %v162
    %v164 = vrot.slane %v145, %v163
    %v165 = vlaneseq
    %v166 = vshrl.u32 %v165, 7
    %v167 = vsub.s32 4, %v166
    %v168 = vrot.slane %v145, %v167
    %v169 = vlaneseq
    %v170 = vshrl.u32 %v169, 7
    %v171 = vsub.s32 5, %v170
    %v172 = vrot.slane %v145, %v171
    %v173 = vlaneseq
    %v174 = vshrl.u32 %v173, 7
    %v175 = vsub.s32 6, %v174
    %v176 = vrot.slane %v145, %v175
    %v177 = vlaneseq
    %v178 = vshrl.u32 %v177, 7
    %v179 = vsub.s32 7, %v178
    %v180 = vrot.slane %v145, %v179
    %v181 = vlaneseq
    %v182 = vshrl.u32 %v181, 7
    %v183 = vsub.s32 0, %v182
    %v184 = vrot.slane %v146, %v183
    %vm194 = vcmask 719872
    %v196 = vsel %vm194, %v42, 0
    %v199 = vsel %vm194, %v43, 0
    %v202 = vsel %vm194, %v44, 0
    %v205 = vsel %vm194, %v45, 0
    %207 = vmatprep.subr.mxu0 0.0
    %208 = vmatpush1.msra.mxu0 0.0
    %209 = vmatprep.subr.mxu0 0.0
    %210 = vmatpush1.msra.mxu0 0.0
    %211 = vmatprep.subr.mxu0 0.0
    %212 = vmatpush1.msra.mxu0 0.0
    %213 = vmatprep.subr.mxu0 0.0
    %214 = vmatpush1.msra.mxu0 0.0
    %215 = vmatprep.subr.mxu0 0.0
    %216 = vmatpush1.msra.mxu0 0.0
    %217 = vmatprep.subr.mxu0 %v137
    %218 = vmatpush1.msra.mxu0 %v136
    %219 = vmatprep.subr.mxu0 %v128
    %220 = vmatpush1.msra.mxu0 %v127
    %221 = vmatprep.subr.mxu0 %v119
    %222 = vmatpush1.msra.mxu0 %v118
    %223 = vmatprep.subr.mxu0 %v110
    %224 = vmatpush1.msra.mxu0 %v109
    %225 = vmatprep.subr.mxu0 %v101
    %226 = vmatpush1.msra.mxu0 %v100
    %227 = vmatprep.subr.mxu0 %v92
    %228 = vmatpush1.msra.mxu0 %v91
    %229 = vmatprep.subr.mxu0 %v83
    %230 = vmatpush1.msra.mxu0 %v82
    %231 = vmatprep.subr.mxu0 %v74
    %232 = vmatpush1.msra.mxu0 %v73
    %233 = vmatprep.subr.mxu0 %v65
    %234 = vmatpush1.msra.mxu0 %v64
    %235 = vmatprep.subr.mxu0 %v56
    %236 = vmatpush1.msra.mxu0 %v55
    %237 = vmatprep.subr.mxu0 %v47
    %238 = vmatpush1.msra.mxu0 %v46
    %239 = vmatprep.subr.mxu0 0.0
    %240 = vmatpush2.msra.mxu0 0.0
    %241 = vmatprep.subr.mxu0 0.0
    %242 = vmatpush2.msra.mxu0 0.0
    %243 = vmatprep.subr.mxu0 0.0
    %244 = vmatpush2.msra.mxu0 0.0
    %245 = vmatprep.subr.mxu0 0.0
    %246 = vmatpush2.msra.mxu0 0.0
    %247 = vmatprep.subr.mxu0 0.0
    %248 = vmatpush2.msra.mxu0 0.0
    %249 = vmatprep.subr.mxu0 0.0
    %250 = vmatpush2.msra.mxu0 0.0
    %251 = vmatprep.subr.mxu0 0.0
    %252 = vmatpush2.msra.mxu0 0.0
    %253 = vmatprep.subr.mxu0 0.0
    %254 = vmatpush2.msra.mxu0 0.0
    %255 = vmatprep.subr.mxu0 0.0
    %256 = vmatpush2.msra.mxu0 0.0
    %257 = vmatprep.subr.mxu0 0.0
    %258 = vmatpush2.msra.mxu0 0.0
    %259 = vmatprep.subr.mxu0 0.0
    %260 = vmatpush2.msra.mxu0 0.0
    %261 = vmatprep.subr.mxu0 0.0
    %262 = vmatpush2.msra.mxu0 0.0
    %263 = vmatprep.subr.mxu0 0.0
    %264 = vmatpush2.msra.mxu0 0.0
    %265 = vmatprep.subr.mxu0 0.0
    %266 = vmatpush2.msra.mxu0 0.0
    %267 = vmatprep.subr.mxu0 0.0
    %268 = vmatpush2.msra.mxu0 0.0
    %269 = vmatprep.subr.mxu0 0.0
    %270 = vmatpush2.msra.mxu0 0.0
    %271 = vmatprep.mubr.f32.mxu0 0.0
    %272 = vmatmul.mubr.f32.gmra.mxu0 %v196
    %v273 = vpop.f32.mrf.mxu0
    %v274 = vadd.f32 %v152, %v273
    %v275 = vpop.f32.mrf.mxu0
    %v276 = vadd.f32 %v156, %v275
    %277 = vmatprep.mubr.f32.mxu0 0.0
    %278 = vmatmul.mubr.f32.gmra.mxu0 %v199
    %v279 = vpop.f32.mrf.mxu0
    %v280 = vadd.f32 %v152, %v279
    %v281 = vpop.f32.mrf.mxu0
    %v282 = vadd.f32 %v156, %v281
    %283 = vmatprep.mubr.f32.mxu0 0.0
    %284 = vmatmul.mubr.f32.gmra.mxu0 %v202
    %v285 = vpop.f32.mrf.mxu0
    %v286 = vadd.f32 %v152, %v285
    %v287 = vpop.f32.mrf.mxu0
    %v288 = vadd.f32 %v156, %v287
    %289 = vmatprep.mubr.f32.mxu0 0.0
    %290 = vmatmul.mubr.f32.gmra.mxu0 %v205
    %v291 = vpop.f32.mrf.mxu0
    %v292 = vadd.f32 %v152, %v291
    %v293 = vpop.f32.mrf.mxu0
    %v294 = vadd.f32 %v156, %v293
    %295 = vdwg.mxu0
    %296 = vmatprep.subr.mxu0 0.0
    %297 = vmatpush1.msra.mxu0 0.0
    %298 = vmatprep.subr.mxu0 0.0
    %299 = vmatpush1.msra.mxu0 0.0
    %300 = vmatprep.subr.mxu0 0.0
    %301 = vmatpush1.msra.mxu0 0.0
    %302 = vmatprep.subr.mxu0 0.0
    %303 = vmatpush1.msra.mxu0 0.0
    %304 = vmatprep.subr.mxu0 0.0
    %305 = vmatpush1.msra.mxu0 0.0
    %306 = vmatprep.subr.mxu0 %v139
    %307 = vmatpush1.msra.mxu0 %v138
    %308 = vmatprep.subr.mxu0 %v130
    %309 = vmatpush1.msra.mxu0 %v129
    %310 = vmatprep.subr.mxu0 %v121
    %311 = vmatpush1.msra.mxu0 %v120
    %312 = vmatprep.subr.mxu0 %v112
    %313 = vmatpush1.msra.mxu0 %v111
    %314 = vmatprep.subr.mxu0 %v103
    %315 = vmatpush1.msra.mxu0 %v102
    %316 = vmatprep.subr.mxu0 %v94
    %317 = vmatpush1.msra.mxu0 %v93
    %318 = vmatprep.subr.mxu0 %v85
    %319 = vmatpush1.msra.mxu0 %v84
    %320 = vmatprep.subr.mxu0 %v76
    %321 = vmatpush1.msra.mxu0 %v75
    %322 = vmatprep.subr.mxu0 %v67
    %323 = vmatpush1.msra.mxu0 %v66
    %324 = vmatprep.subr.mxu0 %v58
    %325 = vmatpush1.msra.mxu0 %v57
    %326 = vmatprep.subr.mxu0 %v49
    %327 = vmatpush1.msra.mxu0 %v48
    %328 = vmatprep.subr.mxu0 0.0
    %329 = vmatpush2.msra.mxu0 0.0
    %330 = vmatprep.subr.mxu0 0.0
    %331 = vmatpush2.msra.mxu0 0.0
    %332 = vmatprep.subr.mxu0 0.0
    %333 = vmatpush2.msra.mxu0 0.0
    %334 = vmatprep.subr.mxu0 0.0
    %335 = vmatpush2.msra.mxu0 0.0
    %336 = vmatprep.subr.mxu0 0.0
    %337 = vmatpush2.msra.mxu0 0.0
    %338 = vmatprep.subr.mxu0 0.0
    %339 = vmatpush2.msra.mxu0 0.0
    %340 = vmatprep.subr.mxu0 0.0
    %341 = vmatpush2.msra.mxu0 0.0
    %342 = vmatprep.subr.mxu0 0.0
    %343 = vmatpush2.msra.mxu0 0.0
    %344 = vmatprep.subr.mxu0 0.0
    %345 = vmatpush2.msra.mxu0 0.0
    %346 = vmatprep.subr.mxu0 0.0
    %347 = vmatpush2.msra.mxu0 0.0
    %348 = vmatprep.subr.mxu0 0.0
    %349 = vmatpush2.msra.mxu0 0.0
    %350 = vmatprep.subr.mxu0 0.0
    %351 = vmatpush2.msra.mxu0 0.0
    %352 = vmatprep.subr.mxu0 0.0
    %353 = vmatpush2.msra.mxu0 0.0
    %354 = vmatprep.subr.mxu0 0.0
    %355 = vmatpush2.msra.mxu0 0.0
    %356 = vmatprep.subr.mxu0 0.0
    %357 = vmatpush2.msra.mxu0 0.0
    %358 = vmatprep.subr.mxu0 0.0
    %359 = vmatpush2.msra.mxu0 0.0
    %360 = vmatprep.mubr.f32.mxu0 0.0
    %361 = vmatmul.mubr.f32.gmra.mxu0 %v196
    %v362 = vpop.f32.mrf.mxu0
    %v363 = vadd.f32 %v160, %v362
    %v364 = vpop.f32.mrf.mxu0
    %v365 = vadd.f32 %v164, %v364
    %366 = vmatprep.mubr.f32.mxu0 0.0
    %367 = vmatmul.mubr.f32.gmra.mxu0 %v199
    %v368 = vpop.f32.mrf.mxu0
    %v369 = vadd.f32 %v160, %v368
    %v370 = vpop.f32.mrf.mxu0
    %v371 = vadd.f32 %v164, %v370
    %372 = vmatprep.mubr.f32.mxu0 0.0
    %373 = vmatmul.mubr.f32.gmra.mxu0 %v202
    %v374 = vpop.f32.mrf.mxu0
    %v375 = vadd.f32 %v160, %v374
    %v376 = vpop.f32.mrf.mxu0
    %v377 = vadd.f32 %v164, %v376
    %378 = vmatprep.mubr.f32.mxu0 0.0
    %379 = vmatmul.mubr.f32.gmra.mxu0 %v205
    %v380 = vpop.f32.mrf.mxu0
    %v381 = vadd.f32 %v160, %v380
    %v382 = vpop.f32.mrf.mxu0
    %v383 = vadd.f32 %v164, %v382
    %384 = vdwg.mxu0
    %385 = vmatprep.subr.mxu0 0.0
    %386 = vmatpush1.msra.mxu0 0.0
    %387 = vmatprep.subr.mxu0 0.0
    %388 = vmatpush1.msra.mxu0 0.0
    %389 = vmatprep.subr.mxu0 0.0
    %390 = vmatpush1.msra.mxu0 0.0
    %391 = vmatprep.subr.mxu0 0.0
    %392 = vmatpush1.msra.mxu0 0.0
    %393 = vmatprep.subr.mxu0 0.0
    %394 = vmatpush1.msra.mxu0 0.0
    %395 = vmatprep.subr.mxu0 %v141
    %396 = vmatpush1.msra.mxu0 %v140
    %397 = vmatprep.subr.mxu0 %v132
    %398 = vmatpush1.msra.mxu0 %v131
    %399 = vmatprep.subr.mxu0 %v123
    %400 = vmatpush1.msra.mxu0 %v122
    %401 = vmatprep.subr.mxu0 %v114
    %402 = vmatpush1.msra.mxu0 %v113
    %403 = vmatprep.subr.mxu0 %v105
    %404 = vmatpush1.msra.mxu0 %v104
    %405 = vmatprep.subr.mxu0 %v96
    %406 = vmatpush1.msra.mxu0 %v95
    %407 = vmatprep.subr.mxu0 %v87
    %408 = vmatpush1.msra.mxu0 %v86
    %409 = vmatprep.subr.mxu0 %v78
    %410 = vmatpush1.msra.mxu0 %v77
    %411 = vmatprep.subr.mxu0 %v69
    %412 = vmatpush1.msra.mxu0 %v68
    %413 = vmatprep.subr.mxu0 %v60
    %414 = vmatpush1.msra.mxu0 %v59
    %415 = vmatprep.subr.mxu0 %v51
    %416 = vmatpush1.msra.mxu0 %v50
    %417 = vmatprep.subr.mxu0 0.0
    %418 = vmatpush2.msra.mxu0 0.0
    %419 = vmatprep.subr.mxu0 0.0
    %420 = vmatpush2.msra.mxu0 0.0
    %421 = vmatprep.subr.mxu0 0.0
    %422 = vmatpush2.msra.mxu0 0.0
    %423 = vmatprep.subr.mxu0 0.0
    %424 = vmatpush2.msra.mxu0 0.0
    %425 = vmatprep.subr.mxu0 0.0
    %426 = vmatpush2.msra.mxu0 0.0
    %427 = vmatprep.subr.mxu0 0.0
    %428 = vmatpush2.msra.mxu0 0.0
    %429 = vmatprep.subr.mxu0 0.0
    %430 = vmatpush2.msra.mxu0 0.0
    %431 = vmatprep.subr.mxu0 0.0
    %432 = vmatpush2.msra.mxu0 0.0
    %433 = vmatprep.subr.mxu0 0.0
    %434 = vmatpush2.msra.mxu0 0.0
    %435 = vmatprep.subr.mxu0 0.0
    %436 = vmatpush2.msra.mxu0 0.0
    %437 = vmatprep.subr.mxu0 0.0
    %438 = vmatpush2.msra.mxu0 0.0
    %439 = vmatprep.subr.mxu0 0.0
    %440 = vmatpush2.msra.mxu0 0.0
    %441 = vmatprep.subr.mxu0 0.0
    %442 = vmatpush2.msra.mxu0 0.0
    %443 = vmatprep.subr.mxu0 0.0
    %444 = vmatpush2.msra.mxu0 0.0
    %445 = vmatprep.subr.mxu0 0.0
    %446 = vmatpush2.msra.mxu0 0.0
    %447 = vmatprep.subr.mxu0 0.0
    %448 = vmatpush2.msra.mxu0 0.0
    %449 = vmatprep.mubr.f32.mxu0 0.0
    %450 = vmatmul.mubr.f32.gmra.mxu0 %v196
    %v451 = vpop.f32.mrf.mxu0
    %v452 = vadd.f32 %v168, %v451
    %v453 = vpop.f32.mrf.mxu0
    %v454 = vadd.f32 %v172, %v453
    %455 = vmatprep.mubr.f32.mxu0 0.0
    %456 = vmatmul.mubr.f32.gmra.mxu0 %v199
    %v457 = vpop.f32.mrf.mxu0
    %v458 = vadd.f32 %v168, %v457
    %v459 = vpop.f32.mrf.mxu0
    %v460 = vadd.f32 %v172, %v459
    %461 = vmatprep.mubr.f32.mxu0 0.0
    %462 = vmatmul.mubr.f32.gmra.mxu0 %v202
    %v463 = vpop.f32.mrf.mxu0
    %v464 = vadd.f32 %v168, %v463
    %v465 = vpop.f32.mrf.mxu0
    %v466 = vadd.f32 %v172, %v465
    %467 = vmatprep.mubr.f32.mxu0 0.0
    %468 = vmatmul.mubr.f32.gmra.mxu0 %v205
    %v469 = vpop.f32.mrf.mxu0
    %v470 = vadd.f32 %v168, %v469
    %v471 = vpop.f32.mrf.mxu0
    %v472 = vadd.f32 %v172, %v471
    %473 = vdwg.mxu0
    %474 = vmatprep.subr.mxu0 0.0
    %475 = vmatpush1.msra.mxu0 0.0
    %476 = vmatprep.subr.mxu0 0.0
    %477 = vmatpush1.msra.mxu0 0.0
    %478 = vmatprep.subr.mxu0 0.0
    %479 = vmatpush1.msra.mxu0 0.0
    %480 = vmatprep.subr.mxu0 0.0
    %481 = vmatpush1.msra.mxu0 0.0
    %482 = vmatprep.subr.mxu0 0.0
    %483 = vmatpush1.msra.mxu0 0.0
    %484 = vmatprep.subr.mxu0 %v143
    %485 = vmatpush1.msra.mxu0 %v142
    %486 = vmatprep.subr.mxu0 %v134
    %487 = vmatpush1.msra.mxu0 %v133
    %488 = vmatprep.subr.mxu0 %v125
    %489 = vmatpush1.msra.mxu0 %v124
    %490 = vmatprep.subr.mxu0 %v116
    %491 = vmatpush1.msra.mxu0 %v115
    %492 = vmatprep.subr.mxu0 %v107
    %493 = vmatpush1.msra.mxu0 %v106
    %494 = vmatprep.subr.mxu0 %v98
    %495 = vmatpush1.msra.mxu0 %v97
    %496 = vmatprep.subr.mxu0 %v89
    %497 = vmatpush1.msra.mxu0 %v88
    %498 = vmatprep.subr.mxu0 %v80
    %499 = vmatpush1.msra.mxu0 %v79
    %500 = vmatprep.subr.mxu0 %v71
    %501 = vmatpush1.msra.mxu0 %v70
    %502 = vmatprep.subr.mxu0 %v62
    %503 = vmatpush1.msra.mxu0 %v61
    %504 = vmatprep.subr.mxu0 %v53
    %505 = vmatpush1.msra.mxu0 %v52
    %506 = vmatprep.subr.mxu0 0.0
    %507 = vmatpush2.msra.mxu0 0.0
    %508 = vmatprep.subr.mxu0 0.0
    %509 = vmatpush2.msra.mxu0 0.0
    %510 = vmatprep.subr.mxu0 0.0
    %511 = vmatpush2.msra.mxu0 0.0
    %512 = vmatprep.subr.mxu0 0.0
    %513 = vmatpush2.msra.mxu0 0.0
    %514 = vmatprep.subr.mxu0 0.0
    %515 = vmatpush2.msra.mxu0 0.0
    %516 = vmatprep.subr.mxu0 0.0
    %517 = vmatpush2.msra.mxu0 0.0
    %518 = vmatprep.subr.mxu0 0.0
    %519 = vmatpush2.msra.mxu0 0.0
    %520 = vmatprep.subr.mxu0 0.0
    %521 = vmatpush2.msra.mxu0 0.0
    %522 = vmatprep.subr.mxu0 0.0
    %523 = vmatpush2.msra.mxu0 0.0
    %524 = vmatprep.subr.mxu0 0.0
    %525 = vmatpush2.msra.mxu0 0.0
    %526 = vmatprep.subr.mxu0 0.0
    %527 = vmatpush2.msra.mxu0 0.0
    %528 = vmatprep.subr.mxu0 0.0
    %529 = vmatpush2.msra.mxu0 0.0
    %530 = vmatprep.subr.mxu0 0.0
    %531 = vmatpush2.msra.mxu0 0.0
    %532 = vmatprep.subr.mxu0 0.0
    %533 = vmatpush2.msra.mxu0 0.0
    %534 = vmatprep.subr.mxu0 0.0
    %535 = vmatpush2.msra.mxu0 0.0
    %536 = vmatprep.subr.mxu0 0.0
    %537 = vmatpush2.msra.mxu0 0.0
    %538 = vmatprep.mubr.f32.mxu0 0.0
    %539 = vmatmul.mubr.f32.gmra.mxu0 %v196
    %v540 = vpop.f32.mrf.mxu0
    %v541 = vadd.f32 %v176, %v540
    %v542 = vpop.f32.mrf.mxu0
    %v543 = vadd.f32 %v180, %v542
    %544 = vmatprep.mubr.f32.mxu0 0.0
    %545 = vmatmul.mubr.f32.gmra.mxu0 %v199
    %v546 = vpop.f32.mrf.mxu0
    %v547 = vadd.f32 %v176, %v546
    %v548 = vpop.f32.mrf.mxu0
    %v549 = vadd.f32 %v180, %v548
    %550 = vmatprep.mubr.f32.mxu0 0.0
    %551 = vmatmul.mubr.f32.gmra.mxu0 %v202
    %v552 = vpop.f32.mrf.mxu0
    %v553 = vadd.f32 %v176, %v552
    %v554 = vpop.f32.mrf.mxu0
    %v555 = vadd.f32 %v180, %v554
    %556 = vmatprep.mubr.f32.mxu0 0.0
    %557 = vmatmul.mubr.f32.gmra.mxu0 %v205
    %v558 = vpop.f32.mrf.mxu0
    %v559 = vadd.f32 %v176, %v558
    %v560 = vpop.f32.mrf.mxu0
    %v561 = vadd.f32 %v180, %v560
    %562 = vdwg.mxu0
    %563 = vmatprep.subr.mxu0 0.0
    %564 = vmatpush1.msra.mxu0 0.0
    %565 = vmatprep.subr.mxu0 0.0
    %566 = vmatpush1.msra.mxu0 0.0
    %567 = vmatprep.subr.mxu0 0.0
    %568 = vmatpush1.msra.mxu0 0.0
    %569 = vmatprep.subr.mxu0 0.0
    %570 = vmatpush1.msra.mxu0 0.0
    %571 = vmatprep.subr.mxu0 0.0
    %572 = vmatpush1.msra.mxu0 0.0
    %573 = vmatprep.subr.mxu0 0.0
    %574 = vmatpush1.msra.mxu0 %v144
    %575 = vmatprep.subr.mxu0 0.0
    %576 = vmatpush1.msra.mxu0 %v135
    %577 = vmatprep.subr.mxu0 0.0
    %578 = vmatpush1.msra.mxu0 %v126
    %579 = vmatprep.subr.mxu0 0.0
    %580 = vmatpush1.msra.mxu0 %v117
    %581 = vmatprep.subr.mxu0 0.0
    %582 = vmatpush1.msra.mxu0 %v108
    %583 = vmatprep.subr.mxu0 0.0
    %584 = vmatpush1.msra.mxu0 %v99
    %585 = vmatprep.subr.mxu0 0.0
    %586 = vmatpush1.msra.mxu0 %v90
    %587 = vmatprep.subr.mxu0 0.0
    %588 = vmatpush1.msra.mxu0 %v81
    %589 = vmatprep.subr.mxu0 0.0
    %590 = vmatpush1.msra.mxu0 %v72
    %591 = vmatprep.subr.mxu0 0.0
    %592 = vmatpush1.msra.mxu0 %v63
    %593 = vmatprep.subr.mxu0 0.0
    %594 = vmatpush1.msra.mxu0 %v54
    %595 = vmatprep.subr.mxu0 0.0
    %596 = vmatpush2.msra.mxu0 0.0
    %597 = vmatprep.subr.mxu0 0.0
    %598 = vmatpush2.msra.mxu0 0.0
    %599 = vmatprep.subr.mxu0 0.0
    %600 = vmatpush2.msra.mxu0 0.0
    %601 = vmatprep.subr.mxu0 0.0
    %602 = vmatpush2.msra.mxu0 0.0
    %603 = vmatprep.subr.mxu0 0.0
    %604 = vmatpush2.msra.mxu0 0.0
    %605 = vmatprep.subr.mxu0 0.0
    %606 = vmatpush2.msra.mxu0 0.0
    %607 = vmatprep.subr.mxu0 0.0
    %608 = vmatpush2.msra.mxu0 0.0
    %609 = vmatprep.subr.mxu0 0.0
    %610 = vmatpush2.msra.mxu0 0.0
    %611 = vmatprep.subr.mxu0 0.0
    %612 = vmatpush2.msra.mxu0 0.0
    %613 = vmatprep.subr.mxu0 0.0
    %614 = vmatpush2.msra.mxu0 0.0
    %615 = vmatprep.subr.mxu0 0.0
    %616 = vmatpush2.msra.mxu0 0.0
    %617 = vmatprep.subr.mxu0 0.0
    %618 = vmatpush2.msra.mxu0 0.0
    %619 = vmatprep.subr.mxu0 0.0
    %620 = vmatpush2.msra.mxu0 0.0
    %621 = vmatprep.subr.mxu0 0.0
    %622 = vmatpush2.msra.mxu0 0.0
    %623 = vmatprep.subr.mxu0 0.0
    %624 = vmatpush2.msra.mxu0 0.0
    %625 = vmatprep.subr.mxu0 0.0
    %626 = vmatpush2.msra.mxu0 0.0
    %627 = vmatprep.mubr.f32.mxu0 0.0
    %628 = vmatmul.mubr.f32.gmra.mxu0 %v196
    %v629 = vpop.f32.mrf.mxu0
    %v630 = vadd.f32 %v184, %v629
    %v631 = vpop.f32.mrf.mxu0
    %632 = vmatprep.mubr.f32.mxu0 0.0
    %633 = vmatmul.mubr.f32.gmra.mxu0 %v199
    %v634 = vpop.f32.mrf.mxu0
    %v635 = vadd.f32 %v184, %v634
    %v636 = vpop.f32.mrf.mxu0
    %637 = vmatprep.mubr.f32.mxu0 0.0
    %638 = vmatmul.mubr.f32.gmra.mxu0 %v202
    %v639 = vpop.f32.mrf.mxu0
    %v640 = vadd.f32 %v184, %v639
    %v641 = vpop.f32.mrf.mxu0
    %642 = vmatprep.mubr.f32.mxu0 0.0
    %643 = vmatmul.mubr.f32.gmra.mxu0 %v205
    %v644 = vpop.f32.mrf.mxu0
    %v645 = vadd.f32 %v184, %v644
    %v646 = vpop.f32.mrf.mxu0
    %647 = vdwg.mxu0
    %v648 = vmul.f32 %v274, %v452
    %v649 = vmul.f32 %v276, %v454
    %v650 = vmul.f32 %v363, %v541
    %v651 = vmul.f32 %v365, %v543
    %v652 = vmul.f32 %v280, %v458
    %v653 = vmul.f32 %v282, %v460
    %v654 = vmul.f32 %v369, %v547
    %v655 = vmul.f32 %v371, %v549
    %v656 = vmul.f32 %v286, %v464
    %v657 = vmul.f32 %v288, %v466
    %v658 = vmul.f32 %v375, %v553
    %v659 = vmul.f32 %v377, %v555
    %v660 = vmul.f32 %v292, %v470
    %v661 = vmul.f32 %v294, %v472
    %v662 = vmul.f32 %v381, %v559
    %v663 = vmul.f32 %v383, %v561
    %v664 = vld [vmem:[%s3] sm:$0xff]
    %v665 = vld [vmem:[%s3 + $0x8] sm:$0xff]
    %v666 = vld [vmem:[%s3 + $0x10] sm:$0xff]
    %v667 = vld [vmem:[%s3 + $0x18] sm:$0xff]
    %v668 = vld [vmem:[%s3 + $0x20] sm:$0xff]
    %v669 = vld [vmem:[%s3 + $0x28] sm:$0xff]
    %v670 = vld [vmem:[%s3 + $0x30] sm:$0xff]
    %v671 = vld [vmem:[%s3 + $0x38] sm:$0xff]
    %v672 = vld [vmem:[%s3 + $0x40] sm:$0xff]
    %v673 = vld [vmem:[%s3 + $0x48] sm:$0xff]
    %v674 = vld [vmem:[%s3 + $0x50] sm:$0xff]
    %v675 = vld [vmem:[%s3 + $0x58] sm:$0xff]
    %v676 = vld [vmem:[%s3 + $0x60] sm:$0xff]
    %v677 = vld [vmem:[%s3 + $0x68] sm:$0xff]
    %v678 = vld [vmem:[%s3 + $0x70] sm:$0xff]
    %v679 = vld [vmem:[%s3 + $0x78] sm:$0xff]
    %v680 = vld [vmem:[%s3 + $0x80] sm:$0xff]
    %v681 = vld [vmem:[%s3 + $0x88] sm:$0xff]
    %v682 = vld [vmem:[%s3 + $0x90] sm:$0xff]
    %v683 = vld [vmem:[%s3 + $0x98] sm:$0xff]
    %v684 = vld [vmem:[%s3 + $0xa0] sm:$0xff]
    %v685 = vld [vmem:[%s3 + $0xa8] sm:$0xff]
    %v686 = vld [vmem:[%s3 + $0xb0] sm:$0xff]
    %v687 = vld [vmem:[%s3 + $0xb8] sm:$0xff]
    %v688 = vld [vmem:[%s3 + $0xc0] sm:$0xff]
    %v689 = vld [vmem:[%s3 + $0xc8] sm:$0xff]
    %v690 = vld [vmem:[%s3 + $0xd0] sm:$0xff]
    %v691 = vld [vmem:[%s3 + $0xd8] sm:$0xff]
    %v692 = vld [vmem:[%s3 + $0xe0] sm:$0xff]
    %v693 = vld [vmem:[%s3 + $0xe8] sm:$0xff]
    %v694 = vld [vmem:[%s3 + $0xf0] sm:$0xff]
    %v695 = vld [vmem:[%s3 + $0xf8] sm:$0xff]
    %v696 = vld [vmem:[%s3 + $0x100] sm:$0xff]
    %v697 = vld [vmem:[%s3 + $0x108] sm:$0xff]
    %v698 = vld [vmem:[%s3 + $0x110] sm:$0xff]
    %v699 = vld [vmem:[%s3 + $0x118] sm:$0xff]
    %v700 = vld [vmem:[%s3 + $0x120] sm:$0xff]
    %v701 = vld [vmem:[%s3 + $0x128] sm:$0xff]
    %v702 = vld [vmem:[%s3 + $0x130] sm:$0xff]
    %v703 = vld [vmem:[%s3 + $0x138] sm:$0xff]
    %v704 = vld [vmem:[%s3 + $0x140] sm:$0xff]
    %v705 = vld [vmem:[%s3 + $0x148] sm:$0xff]
    %v706 = vld [vmem:[%s3 + $0x150] sm:$0xff]
    %v707 = vld [vmem:[%s3 + $0x158] sm:$0xff]
    %v708 = vld [vmem:[%s3 + $0x160] sm:$0xff]
    %v709 = vld [vmem:[%s3 + $0x168] sm:$0xff]
    %v710 = vld [vmem:[%s3 + $0x170] sm:$0xff]
    %v711 = vld [vmem:[%s3 + $0x178] sm:$0xff]
    %v712 = vld [vmem:[%s3 + $0x180] sm:$0xff]
    %v713 = vld [vmem:[%s3 + $0x188] sm:$0xff]
    %v714 = vld [vmem:[%s3 + $0x190] sm:$0xff]
    %v715 = vld [vmem:[%s3 + $0x198] sm:$0xff]
    %v716 = vld [vmem:[%s3 + $0x1a0] sm:$0xff]
    %v717 = vld [vmem:[%s3 + $0x1a8] sm:$0xff]
    %v718 = vld [vmem:[%s3 + $0x1b0] sm:$0xff]
    %v719 = vld [vmem:[%s3 + $0x1b8] sm:$0xff]
    %v720 = vld [vmem:[%s3 + $0x1c0] sm:$0xff]
    %v721 = vld [vmem:[%s3 + $0x1c8] sm:$0xff]
    %v722 = vld [vmem:[%s3 + $0x1d0] sm:$0xff]
    %v723 = vld [vmem:[%s3 + $0x1d8] sm:$0xff]
    %v724 = vld [vmem:[%s3 + $0x1e0] sm:$0xff]
    %v725 = vld [vmem:[%s3 + $0x1e8] sm:$0xff]
    %v726 = vld [vmem:[%s3 + $0x1f0] sm:$0xff]
    %v727 = vld [vmem:[%s3 + $0x1f8] sm:$0xff]
    %728 = vmatprep.subr.mxu0 0.0
    %729 = vmatpush1.msra.mxu0 %v679
    %730 = vmatprep.subr.mxu0 0.0
    %731 = vmatpush1.msra.mxu0 %v678
    %732 = vmatprep.subr.mxu0 0.0
    %733 = vmatpush1.msra.mxu0 %v677
    %734 = vmatprep.subr.mxu0 0.0
    %735 = vmatpush1.msra.mxu0 %v676
    %736 = vmatprep.subr.mxu0 0.0
    %737 = vmatpush1.msra.mxu0 %v675
    %738 = vmatprep.subr.mxu0 0.0
    %739 = vmatpush1.msra.mxu0 %v674
    %740 = vmatprep.subr.mxu0 0.0
    %741 = vmatpush1.msra.mxu0 %v673
    %742 = vmatprep.subr.mxu0 0.0
    %743 = vmatpush1.msra.mxu0 %v672
    %744 = vmatprep.subr.mxu0 0.0
    %745 = vmatpush1.msra.mxu0 %v671
    %746 = vmatprep.subr.mxu0 0.0
    %747 = vmatpush1.msra.mxu0 %v670
    %748 = vmatprep.subr.mxu0 0.0
    %749 = vmatpush1.msra.mxu0 %v669
    %750 = vmatprep.subr.mxu0 0.0
    %751 = vmatpush1.msra.mxu0 %v668
    %752 = vmatprep.subr.mxu0 0.0
    %753 = vmatpush1.msra.mxu0 %v667
    %754 = vmatprep.subr.mxu0 0.0
    %755 = vmatpush1.msra.mxu0 %v666
    %756 = vmatprep.subr.mxu0 0.0
    %757 = vmatpush1.msra.mxu0 %v665
    %758 = vmatprep.subr.mxu0 0.0
    %759 = vmatpush1.msra.mxu0 %v664
    %760 = vmatprep.subr.mxu0 0.0
    %761 = vmatpush2.msra.mxu0 %v695
    %762 = vmatprep.subr.mxu0 0.0
    %763 = vmatpush2.msra.mxu0 %v694
    %764 = vmatprep.subr.mxu0 0.0
    %765 = vmatpush2.msra.mxu0 %v693
    %766 = vmatprep.subr.mxu0 0.0
    %767 = vmatpush2.msra.mxu0 %v692
    %768 = vmatprep.subr.mxu0 0.0
    %769 = vmatpush2.msra.mxu0 %v691
    %770 = vmatprep.subr.mxu0 0.0
    %771 = vmatpush2.msra.mxu0 %v690
    %772 = vmatprep.subr.mxu0 0.0
    %773 = vmatpush2.msra.mxu0 %v689
    %774 = vmatprep.subr.mxu0 0.0
    %775 = vmatpush2.msra.mxu0 %v688
    %776 = vmatprep.subr.mxu0 0.0
    %777 = vmatpush2.msra.mxu0 %v687
    %778 = vmatprep.subr.mxu0 0.0
    %779 = vmatpush2.msra.mxu0 %v686
    %780 = vmatprep.subr.mxu0 0.0
    %781 = vmatpush2.msra.mxu0 %v685
    %782 = vmatprep.subr.mxu0 0.0
    %783 = vmatpush2.msra.mxu0 %v684
    %784 = vmatprep.subr.mxu0 0.0
    %785 = vmatpush2.msra.mxu0 %v683
    %786 = vmatprep.subr.mxu0 0.0
    %787 = vmatpush2.msra.mxu0 %v682
    %788 = vmatprep.subr.mxu0 0.0
    %789 = vmatpush2.msra.mxu0 %v681
    %790 = vmatprep.subr.mxu0 0.0
    %791 = vmatpush2.msra.mxu0 %v680
    %792 = vmatprep.mubr.f32.mxu0 %v649
    %793 = vmatmul.mubr.f32.gmra.mxu0 %v648
    %v794 = vpop.f32.mrf.mxu0
    %v795 = vadd.f32 0.0, %v794
    %v796 = vpop.f32.mrf.mxu0
    %797 = vmatprep.mubr.f32.mxu0 %v653
    %798 = vmatmul.mubr.f32.gmra.mxu0 %v652
    %v799 = vpop.f32.mrf.mxu0
    %v800 = vadd.f32 0.0, %v799
    %v801 = vpop.f32.mrf.mxu0
    %802 = vmatprep.mubr.f32.mxu0 %v657
    %803 = vmatmul.mubr.f32.gmra.mxu0 %v656
    %v804 = vpop.f32.mrf.mxu0
    %v805 = vadd.f32 0.0, %v804
    %v806 = vpop.f32.mrf.mxu0
    %807 = vmatprep.mubr.f32.mxu0 %v661
    %808 = vmatmul.mubr.f32.gmra.mxu0 %v660
    %v809 = vpop.f32.mrf.mxu0
    %v810 = vadd.f32 0.0, %v809
    %v811 = vpop.f32.mrf.mxu0
    %812 = vdwg.mxu0
    %813 = vmatprep.subr.mxu0 0.0
    %814 = vmatpush1.msra.mxu0 %v711
    %815 = vmatprep.subr.mxu0 0.0
    %816 = vmatpush1.msra.mxu0 %v710
    %817 = vmatprep.subr.mxu0 0.0
    %818 = vmatpush1.msra.mxu0 %v709
    %819 = vmatprep.subr.mxu0 0.0
    %820 = vmatpush1.msra.mxu0 %v708
    %821 = vmatprep.subr.mxu0 0.0
    %822 = vmatpush1.msra.mxu0 %v707
    %823 = vmatprep.subr.mxu0 0.0
    %824 = vmatpush1.msra.mxu0 %v706
    %825 = vmatprep.subr.mxu0 0.0
    %826 = vmatpush1.msra.mxu0 %v705
    %827 = vmatprep.subr.mxu0 0.0
    %828 = vmatpush1.msra.mxu0 %v704
    %829 = vmatprep.subr.mxu0 0.0
    %830 = vmatpush1.msra.mxu0 %v703
    %831 = vmatprep.subr.mxu0 0.0
    %832 = vmatpush1.msra.mxu0 %v702
    %833 = vmatprep.subr.mxu0 0.0
    %834 = vmatpush1.msra.mxu0 %v701
    %835 = vmatprep.subr.mxu0 0.0
    %836 = vmatpush1.msra.mxu0 %v700
    %837 = vmatprep.subr.mxu0 0.0
    %838 = vmatpush1.msra.mxu0 %v699
    %839 = vmatprep.subr.mxu0 0.0
    %840 = vmatpush1.msra.mxu0 %v698
    %841 = vmatprep.subr.mxu0 0.0
    %842 = vmatpush1.msra.mxu0 %v697
    %843 = vmatprep.subr.mxu0 0.0
    %844 = vmatpush1.msra.mxu0 %v696
    %845 = vmatprep.subr.mxu0 0.0
    %846 = vmatpush2.msra.mxu0 %v727
    %847 = vmatprep.subr.mxu0 0.0
    %848 = vmatpush2.msra.mxu0 %v726
    %849 = vmatprep.subr.mxu0 0.0
    %850 = vmatpush2.msra.mxu0 %v725
    %851 = vmatprep.subr.mxu0 0.0
    %852 = vmatpush2.msra.mxu0 %v724
    %853 = vmatprep.subr.mxu0 0.0
    %854 = vmatpush2.msra.mxu0 %v723
    %855 = vmatprep.subr.mxu0 0.0
    %856 = vmatpush2.msra.mxu0 %v722
    %857 = vmatprep.subr.mxu0 0.0
    %858 = vmatpush2.msra.mxu0 %v721
    %859 = vmatprep.subr.mxu0 0.0
    %860 = vmatpush2.msra.mxu0 %v720
    %861 = vmatprep.subr.mxu0 0.0
    %862 = vmatpush2.msra.mxu0 %v719
    %863 = vmatprep.subr.mxu0 0.0
    %864 = vmatpush2.msra.mxu0 %v718
    %865 = vmatprep.subr.mxu0 0.0
    %866 = vmatpush2.msra.mxu0 %v717
    %867 = vmatprep.subr.mxu0 0.0
    %868 = vmatpush2.msra.mxu0 %v716
    %869 = vmatprep.subr.mxu0 0.0
    %870 = vmatpush2.msra.mxu0 %v715
    %871 = vmatprep.subr.mxu0 0.0
    %872 = vmatpush2.msra.mxu0 %v714
    %873 = vmatprep.subr.mxu0 0.0
    %874 = vmatpush2.msra.mxu0 %v713
    %875 = vmatprep.subr.mxu0 0.0
    %876 = vmatpush2.msra.mxu0 %v712
    %877 = vmatprep.mubr.f32.mxu0 %v651
    %878 = vmatmul.mubr.f32.gmra.mxu0 %v650
    %v879 = vpop.f32.mrf.mxu0
    %v880 = vadd.f32 %v795, %v879
    %v881 = vpop.f32.mrf.mxu0
    %882 = vmatprep.mubr.f32.mxu0 %v655
    %883 = vmatmul.mubr.f32.gmra.mxu0 %v654
    %v884 = vpop.f32.mrf.mxu0
    %v885 = vadd.f32 %v800, %v884
    %v886 = vpop.f32.mrf.mxu0
    %887 = vmatprep.mubr.f32.mxu0 %v659
    %888 = vmatmul.mubr.f32.gmra.mxu0 %v658
    %v889 = vpop.f32.mrf.mxu0
    %v890 = vadd.f32 %v805, %v889
    %v891 = vpop.f32.mrf.mxu0
    %892 = vmatprep.mubr.f32.mxu0 %v663
    %893 = vmatmul.mubr.f32.gmra.mxu0 %v662
    %v894 = vpop.f32.mrf.mxu0
    %v895 = vadd.f32 %v810, %v894
    %v896 = vpop.f32.mrf.mxu0
    %897 = vdwg.mxu0
    %v898 = vmul.f32 %v880, 0.17677669
    %v899 = vmul.f32 %v885, 0.17677669
    %v900 = vmul.f32 %v890, 0.17677669
    %v901 = vmul.f32 %v895, 0.17677669
    %906 = vrot.lane.b32.xlu0 %v898, 124
    %v907 = vpop.permute.xlu0 %906
    %908 = vrot.lane.b32.xlu0 %v899, 124
    %v909 = vpop.permute.xlu0 %908
    %910 = vrot.lane.b32.xlu0 %v900, 124
    %v911 = vpop.permute.xlu0 %910
    %912 = vrot.lane.b32.xlu0 %v901, 124
    %v913 = vpop.permute.xlu0 %912
    %v918 = vmax.f32 %v898, %v907
    %v919 = vmax.f32 %v899, %v909
    %v920 = vmax.f32 %v900, %v911
    %v921 = vmax.f32 %v901, %v913
    %922 = vrot.lane.b32.xlu0 %v898, 120
    %v923 = vpop.permute.xlu0 %922
    %924 = vrot.lane.b32.xlu0 %v899, 120
    %v925 = vpop.permute.xlu0 %924
    %926 = vrot.lane.b32.xlu0 %v900, 120
    %v927 = vpop.permute.xlu0 %926
    %928 = vrot.lane.b32.xlu0 %v901, 120
    %v929 = vpop.permute.xlu0 %928
    %v934 = vmax.f32 %v918, %v923
    %v935 = vmax.f32 %v919, %v925
    %v936 = vmax.f32 %v920, %v927
    %v937 = vmax.f32 %v921, %v929
    %938 = vrot.lane.b32.xlu0 %v898, 116
    %v939 = vpop.permute.xlu0 %938
    %940 = vrot.lane.b32.xlu0 %v899, 116
    %v941 = vpop.permute.xlu0 %940
    %942 = vrot.lane.b32.xlu0 %v900, 116
    %v943 = vpop.permute.xlu0 %942
    %944 = vrot.lane.b32.xlu0 %v901, 116
    %v945 = vpop.permute.xlu0 %944
    %v950 = vmax.f32 %v934, %v939
    %v951 = vmax.f32 %v935, %v941
    %v952 = vmax.f32 %v936, %v943
    %v953 = vmax.f32 %v937, %v945
    %v954 = vsub.f32 %v898, %v950
    %v955 = vsub.f32 %v899, %v951
    %v956 = vsub.f32 %v900, %v952
    %v957 = vsub.f32 %v901, %v953
    %v958 = vmul.f32 %v954, 1.442695
    %v959 = vpow.pop %v958
    %v960 = vmul.f32 %v955, 1.442695
    %v961 = vpow.pop %v960
    %v962 = vmul.f32 %v956, 1.442695
    %v963 = vpow.pop %v962
    %v964 = vmul.f32 %v957, 1.442695
    %v965 = vpow.pop %v964
    %970 = vrot.lane.b32.xlu0 %v950, 4
    %v971 = vpop.permute.xlu0 %970
    %972 = vrot.lane.b32.xlu0 %v951, 4
    %v973 = vpop.permute.xlu0 %972
    %974 = vrot.lane.b32.xlu0 %v952, 4
    %v975 = vpop.permute.xlu0 %974
    %976 = vrot.lane.b32.xlu0 %v953, 4
    %v977 = vpop.permute.xlu0 %976
    %v982 = vsub.f32 %v898, %v971
    %v983 = vsub.f32 %v899, %v973
    %v984 = vsub.f32 %v900, %v975
    %v985 = vsub.f32 %v901, %v977
    %v986 = vmul.f32 %v982, 1.442695
    %v987 = vpow.pop %v986
    %v988 = vmul.f32 %v983, 1.442695
    %v989 = vpow.pop %v988
    %v990 = vmul.f32 %v984, 1.442695
    %v991 = vpow.pop %v990
    %v992 = vmul.f32 %v985, 1.442695
    %v993 = vpow.pop %v992
    %994 = vrot.lane.b32.xlu0 %v950, 8
    %v995 = vpop.permute.xlu0 %994
    %996 = vrot.lane.b32.xlu0 %v951, 8
    %v997 = vpop.permute.xlu0 %996
    %998 = vrot.lane.b32.xlu0 %v952, 8
    %v999 = vpop.permute.xlu0 %998
    %1000 = vrot.lane.b32.xlu0 %v953, 8
    %v1001 = vpop.permute.xlu0 %1000
    %v1006 = vsub.f32 %v898, %v995
    %v1007 = vsub.f32 %v899, %v997
    %v1008 = vsub.f32 %v900, %v999
    %v1009 = vsub.f32 %v901, %v1001
    %v1010 = vmul.f32 %v1006, 1.442695
    %v1011 = vpow.pop %v1010
    %v1012 = vmul.f32 %v1007, 1.442695
    %v1013 = vpow.pop %v1012
    %v1014 = vmul.f32 %v1008, 1.442695
    %v1015 = vpow.pop %v1014
    %v1016 = vmul.f32 %v1009, 1.442695
    %v1017 = vpow.pop %v1016
    %1018 = vrot.lane.b32.xlu0 %v950, 12
    %v1019 = vpop.permute.xlu0 %1018
    %1020 = vrot.lane.b32.xlu0 %v951, 12
    %v1021 = vpop.permute.xlu0 %1020
    %1022 = vrot.lane.b32.xlu0 %v952, 12
    %v1023 = vpop.permute.xlu0 %1022
    %1024 = vrot.lane.b32.xlu0 %v953, 12
    %v1025 = vpop.permute.xlu0 %1024
    %v1030 = vsub.f32 %v898, %v1019
    %v1031 = vsub.f32 %v899, %v1021
    %v1032 = vsub.f32 %v900, %v1023
    %v1033 = vsub.f32 %v901, %v1025
    %v1034 = vmul.f32 %v1030, 1.442695
    %v1035 = vpow.pop %v1034
    %v1036 = vmul.f32 %v1031, 1.442695
    %v1037 = vpow.pop %v1036
    %v1038 = vmul.f32 %v1032, 1.442695
    %v1039 = vpow.pop %v1038
    %v1040 = vmul.f32 %v1033, 1.442695
    %v1041 = vpow.pop %v1040
    %1046 = vrot.lane.b32.xlu0 %v987, 124
    %v1047 = vpop.permute.xlu0 %1046
    %1048 = vrot.lane.b32.xlu0 %v989, 124
    %v1049 = vpop.permute.xlu0 %1048
    %1050 = vrot.lane.b32.xlu0 %v991, 124
    %v1051 = vpop.permute.xlu0 %1050
    %1052 = vrot.lane.b32.xlu0 %v993, 124
    %v1053 = vpop.permute.xlu0 %1052
    %v1058 = vadd.f32 %v959, %v1047
    %v1059 = vadd.f32 %v961, %v1049
    %v1060 = vadd.f32 %v963, %v1051
    %v1061 = vadd.f32 %v965, %v1053
    %1066 = vrot.lane.b32.xlu0 %v1011, 120
    %v1067 = vpop.permute.xlu0 %1066
    %1068 = vrot.lane.b32.xlu0 %v1013, 120
    %v1069 = vpop.permute.xlu0 %1068
    %1070 = vrot.lane.b32.xlu0 %v1015, 120
    %v1071 = vpop.permute.xlu0 %1070
    %1072 = vrot.lane.b32.xlu0 %v1017, 120
    %v1073 = vpop.permute.xlu0 %1072
    %v1078 = vadd.f32 %v1058, %v1067
    %v1079 = vadd.f32 %v1059, %v1069
    %v1080 = vadd.f32 %v1060, %v1071
    %v1081 = vadd.f32 %v1061, %v1073
    %1086 = vrot.lane.b32.xlu0 %v1035, 116
    %v1087 = vpop.permute.xlu0 %1086
    %1088 = vrot.lane.b32.xlu0 %v1037, 116
    %v1089 = vpop.permute.xlu0 %1088
    %1090 = vrot.lane.b32.xlu0 %v1039, 116
    %v1091 = vpop.permute.xlu0 %1090
    %1092 = vrot.lane.b32.xlu0 %v1041, 116
    %v1093 = vpop.permute.xlu0 %1092
    %v1098 = vadd.f32 %v1078, %v1087
    %v1099 = vadd.f32 %v1079, %v1089
    %v1100 = vadd.f32 %v1080, %v1091
    %v1101 = vadd.f32 %v1081, %v1093
    %v1102 = vrcp.pop %v1098
    %v1103 = vrcp.pop %v1099
    %v1104 = vrcp.pop %v1100
    %v1105 = vrcp.pop %v1101
    %v1106 = vmul.f32 %v959, %v1102
    %v1107 = vmul.f32 %v961, %v1103
    %v1108 = vmul.f32 %v963, %v1104
    %v1109 = vmul.f32 %v965, %v1105
    %1114 = vrot.lane.b32.xlu0 %v1102, 4
    %v1115 = vpop.permute.xlu0 %1114
    %1116 = vrot.lane.b32.xlu0 %v1103, 4
    %v1117 = vpop.permute.xlu0 %1116
    %1118 = vrot.lane.b32.xlu0 %v1104, 4
    %v1119 = vpop.permute.xlu0 %1118
    %1120 = vrot.lane.b32.xlu0 %v1105, 4
    %v1121 = vpop.permute.xlu0 %1120
    %v1126 = vmul.f32 %v987, %v1115
    %v1127 = vmul.f32 %v989, %v1117
    %v1128 = vmul.f32 %v991, %v1119
    %v1129 = vmul.f32 %v993, %v1121
    %1130 = vrot.lane.b32.xlu0 %v1102, 8
    %v1131 = vpop.permute.xlu0 %1130
    %1132 = vrot.lane.b32.xlu0 %v1103, 8
    %v1133 = vpop.permute.xlu0 %1132
    %1134 = vrot.lane.b32.xlu0 %v1104, 8
    %v1135 = vpop.permute.xlu0 %1134
    %1136 = vrot.lane.b32.xlu0 %v1105, 8
    %v1137 = vpop.permute.xlu0 %1136
    %v1142 = vmul.f32 %v1011, %v1131
    %v1143 = vmul.f32 %v1013, %v1133
    %v1144 = vmul.f32 %v1015, %v1135
    %v1145 = vmul.f32 %v1017, %v1137
    %1146 = vrot.lane.b32.xlu0 %v1102, 12
    %v1147 = vpop.permute.xlu0 %1146
    %1148 = vrot.lane.b32.xlu0 %v1103, 12
    %v1149 = vpop.permute.xlu0 %1148
    %1150 = vrot.lane.b32.xlu0 %v1104, 12
    %v1151 = vpop.permute.xlu0 %1150
    %1152 = vrot.lane.b32.xlu0 %v1105, 12
    %v1153 = vpop.permute.xlu0 %1152
    %v1158 = vmul.f32 %v1035, %v1147
    %v1159 = vmul.f32 %v1037, %v1149
    %v1160 = vmul.f32 %v1039, %v1151
    %v1161 = vmul.f32 %v1041, %v1153
    %v1162 = vmul.f32 %v880, %v880
    %v1163 = vmul.f32 %v885, %v885
    %v1164 = vmul.f32 %v890, %v890
    %v1165 = vmul.f32 %v895, %v895
    %v1166 = vsub.f32 0.0, %v1106
    %v1167 = vsub.f32 0.0, %v1107
    %v1168 = vsub.f32 0.0, %v1108
    %v1169 = vsub.f32 0.0, %v1109
    %v1170 = vadd.f32 %v1106, 1e-08
    %v1171 = vadd.f32 %v1107, 1e-08
    %v1172 = vadd.f32 %v1108, 1e-08
    %v1173 = vadd.f32 %v1109, 1e-08
    %v1174 = vlog2.pop %v1170
    %v1175 = vmul.f32 %v1174, 0.6931472
    %v1176 = vlog2.pop %v1171
    %v1177 = vmul.f32 %v1176, 0.6931472
    %v1178 = vlog2.pop %v1172
    %v1179 = vmul.f32 %v1178, 0.6931472
    %v1180 = vlog2.pop %v1173
    %v1181 = vmul.f32 %v1180, 0.6931472
    %v1182 = vmul.f32 %v1166, %v1175
    %v1183 = vmul.f32 %v1167, %v1177
    %v1184 = vmul.f32 %v1168, %v1179
    %v1185 = vmul.f32 %v1169, %v1181
    %1190 = vrot.lane.b32.xlu0 %v1162, 124
    %v1191 = vpop.permute.xlu0 %1190
    %1192 = vrot.lane.b32.xlu0 %v1163, 124
    %v1193 = vpop.permute.xlu0 %1192
    %1194 = vrot.lane.b32.xlu0 %v1164, 124
    %v1195 = vpop.permute.xlu0 %1194
    %1196 = vrot.lane.b32.xlu0 %v1165, 124
    %v1197 = vpop.permute.xlu0 %1196
    %v1202 = vadd.f32 %v1162, %v1191
    %v1203 = vadd.f32 %v1163, %v1193
    %v1204 = vadd.f32 %v1164, %v1195
    %v1205 = vadd.f32 %v1165, %v1197
    %v1206 = vadd.f32 %v1126, 1e-08
    %v1207 = vadd.f32 %v1127, 1e-08
    %v1208 = vadd.f32 %v1128, 1e-08
    %v1209 = vadd.f32 %v1129, 1e-08
    %v1210 = vlog2.pop %v1206
    %v1211 = vmul.f32 %v1210, 0.6931472
    %v1212 = vlog2.pop %v1207
    %v1213 = vmul.f32 %v1212, 0.6931472
    %v1214 = vlog2.pop %v1208
    %v1215 = vmul.f32 %v1214, 0.6931472
    %v1216 = vlog2.pop %v1209
    %v1217 = vmul.f32 %v1216, 0.6931472
    %v1218 = vmul.f32 %v1126, %v1211
    %v1219 = vmul.f32 %v1127, %v1213
    %v1220 = vmul.f32 %v1128, %v1215
    %v1221 = vmul.f32 %v1129, %v1217
    %1226 = vrot.lane.b32.xlu0 %v1218, 124
    %v1227 = vpop.permute.xlu0 %1226
    %1228 = vrot.lane.b32.xlu0 %v1219, 124
    %v1229 = vpop.permute.xlu0 %1228
    %1230 = vrot.lane.b32.xlu0 %v1220, 124
    %v1231 = vpop.permute.xlu0 %1230
    %1232 = vrot.lane.b32.xlu0 %v1221, 124
    %v1233 = vpop.permute.xlu0 %1232
    %v1238 = vsub.f32 %v1182, %v1227
    %v1239 = vsub.f32 %v1183, %v1229
    %v1240 = vsub.f32 %v1184, %v1231
    %v1241 = vsub.f32 %v1185, %v1233
    %1242 = vrot.lane.b32.xlu0 %v1162, 120
    %v1243 = vpop.permute.xlu0 %1242
    %1244 = vrot.lane.b32.xlu0 %v1163, 120
    %v1245 = vpop.permute.xlu0 %1244
    %1246 = vrot.lane.b32.xlu0 %v1164, 120
    %v1247 = vpop.permute.xlu0 %1246
    %1248 = vrot.lane.b32.xlu0 %v1165, 120
    %v1249 = vpop.permute.xlu0 %1248
    %v1254 = vadd.f32 %v1202, %v1243
    %v1255 = vadd.f32 %v1203, %v1245
    %v1256 = vadd.f32 %v1204, %v1247
    %v1257 = vadd.f32 %v1205, %v1249
    %v1258 = vadd.f32 %v1142, 1e-08
    %v1259 = vadd.f32 %v1143, 1e-08
    %v1260 = vadd.f32 %v1144, 1e-08
    %v1261 = vadd.f32 %v1145, 1e-08
    %v1262 = vlog2.pop %v1258
    %v1263 = vmul.f32 %v1262, 0.6931472
    %v1264 = vlog2.pop %v1259
    %v1265 = vmul.f32 %v1264, 0.6931472
    %v1266 = vlog2.pop %v1260
    %v1267 = vmul.f32 %v1266, 0.6931472
    %v1268 = vlog2.pop %v1261
    %v1269 = vmul.f32 %v1268, 0.6931472
    %v1270 = vmul.f32 %v1142, %v1263
    %v1271 = vmul.f32 %v1143, %v1265
    %v1272 = vmul.f32 %v1144, %v1267
    %v1273 = vmul.f32 %v1145, %v1269
    %1278 = vrot.lane.b32.xlu0 %v1270, 120
    %v1279 = vpop.permute.xlu0 %1278
    %1280 = vrot.lane.b32.xlu0 %v1271, 120
    %v1281 = vpop.permute.xlu0 %1280
    %1282 = vrot.lane.b32.xlu0 %v1272, 120
    %v1283 = vpop.permute.xlu0 %1282
    %1284 = vrot.lane.b32.xlu0 %v1273, 120
    %v1285 = vpop.permute.xlu0 %1284
    %v1290 = vsub.f32 %v1238, %v1279
    %v1291 = vsub.f32 %v1239, %v1281
    %v1292 = vsub.f32 %v1240, %v1283
    %v1293 = vsub.f32 %v1241, %v1285
    %1294 = vrot.lane.b32.xlu0 %v1162, 116
    %v1295 = vpop.permute.xlu0 %1294
    %1296 = vrot.lane.b32.xlu0 %v1163, 116
    %v1297 = vpop.permute.xlu0 %1296
    %1298 = vrot.lane.b32.xlu0 %v1164, 116
    %v1299 = vpop.permute.xlu0 %1298
    %1300 = vrot.lane.b32.xlu0 %v1165, 116
    %v1301 = vpop.permute.xlu0 %1300
    %v1306 = vadd.f32 %v1254, %v1295
    %v1307 = vadd.f32 %v1255, %v1297
    %v1308 = vadd.f32 %v1256, %v1299
    %v1309 = vadd.f32 %v1257, %v1301
    %v1310 = vadd.f32 %v1158, 1e-08
    %v1311 = vadd.f32 %v1159, 1e-08
    %v1312 = vadd.f32 %v1160, 1e-08
    %v1313 = vadd.f32 %v1161, 1e-08
    %v1314 = vlog2.pop %v1310
    %v1315 = vmul.f32 %v1314, 0.6931472
    %v1316 = vlog2.pop %v1311
    %v1317 = vmul.f32 %v1316, 0.6931472
    %v1318 = vlog2.pop %v1312
    %v1319 = vmul.f32 %v1318, 0.6931472
    %v1320 = vlog2.pop %v1313
    %v1321 = vmul.f32 %v1320, 0.6931472
    %v1322 = vmul.f32 %v1158, %v1315
    %v1323 = vmul.f32 %v1159, %v1317
    %v1324 = vmul.f32 %v1160, %v1319
    %v1325 = vmul.f32 %v1161, %v1321
    %1330 = vrot.lane.b32.xlu0 %v1322, 116
    %v1331 = vpop.permute.xlu0 %1330
    %1332 = vrot.lane.b32.xlu0 %v1323, 116
    %v1333 = vpop.permute.xlu0 %1332
    %1334 = vrot.lane.b32.xlu0 %v1324, 116
    %v1335 = vpop.permute.xlu0 %1334
    %1336 = vrot.lane.b32.xlu0 %v1325, 116
    %v1337 = vpop.permute.xlu0 %1336
    %v1342 = vsub.f32 %v1290, %v1331
    %v1343 = vsub.f32 %v1291, %v1333
    %v1344 = vsub.f32 %v1292, %v1335
    %v1345 = vsub.f32 %v1293, %v1337
    %vm1346 = vcmask 31744
    %v1347 = vsel %vm1346, %v1106, %v1126
    %v1348 = vsel %vm1346, %v1107, %v1127
    %v1349 = vsel %vm1346, %v1108, %v1128
    %v1350 = vsel %vm1346, %v1109, %v1129
    %vm1351 = vcmask 64512
    %v1352 = vsel %vm1351, %v1347, %v1142
    %v1353 = vsel %vm1351, %v1348, %v1143
    %v1354 = vsel %vm1351, %v1349, %v1144
    %v1355 = vsel %vm1351, %v1350, %v1145
    %vm1356 = vcmask 97280
    %v1357 = vsel %vm1356, %v1352, %v1158
    %v1358 = vsel %vm1356, %v1353, %v1159
    %v1359 = vsel %vm1356, %v1354, %v1160
    %v1360 = vsel %vm1356, %v1355, %v1161
    %v1361 = vld [vmem:[%s4] sm:$0xff]
    %v1362 = vld [vmem:[%s4 + $0x8] sm:$0xff]
    %vm1363 = vcmask 130048
    %v1365 = vsel %vm1363, %v1357, 0
    %v1368 = vsel %vm1363, %v1358, 0
    %v1371 = vsel %vm1363, %v1359, 0
    %v1374 = vsel %vm1363, %v1360, 0
    %1376 = vmatprep.subr.mxu0 0.0
    %1377 = vmatpush1.msra.mxu0 0.0
    %1378 = vmatprep.subr.mxu0 0.0
    %1379 = vmatpush1.msra.mxu0 0.0
    %1380 = vmatprep.subr.mxu0 0.0
    %1381 = vmatpush1.msra.mxu0 0.0
    %1382 = vmatprep.subr.mxu0 0.0
    %1383 = vmatpush1.msra.mxu0 0.0
    %1384 = vmatprep.subr.mxu0 0.0
    %1385 = vmatpush1.msra.mxu0 0.0
    %1386 = vmatprep.subr.mxu0 0.0
    %1387 = vmatpush1.msra.mxu0 0.0
    %1388 = vmatprep.subr.mxu0 0.0
    %1389 = vmatpush1.msra.mxu0 0.0
    %1390 = vmatprep.subr.mxu0 0.0
    %1391 = vmatpush1.msra.mxu0 0.0
    %1392 = vmatprep.subr.mxu0 0.0
    %1393 = vmatpush1.msra.mxu0 0.0
    %1394 = vmatprep.subr.mxu0 0.0
    %1395 = vmatpush1.msra.mxu0 0.0
    %1396 = vmatprep.subr.mxu0 0.0
    %1397 = vmatpush1.msra.mxu0 0.0
    %1398 = vmatprep.subr.mxu0 0.0
    %1399 = vmatpush1.msra.mxu0 0.0
    %1400 = vmatprep.subr.mxu0 0.0
    %1401 = vmatpush1.msra.mxu0 0.0
    %1402 = vmatprep.subr.mxu0 0.0
    %1403 = vmatpush1.msra.mxu0 0.0
    %1404 = vmatprep.subr.mxu0 0.0
    %1405 = vmatpush1.msra.mxu0 %v1362
    %1406 = vmatprep.subr.mxu0 0.0
    %1407 = vmatpush1.msra.mxu0 %v1361
    %1408 = vmatprep.subr.mxu0 0.0
    %1409 = vmatpush2.msra.mxu0 0.0
    %1410 = vmatprep.subr.mxu0 0.0
    %1411 = vmatpush2.msra.mxu0 0.0
    %1412 = vmatprep.subr.mxu0 0.0
    %1413 = vmatpush2.msra.mxu0 0.0
    %1414 = vmatprep.subr.mxu0 0.0
    %1415 = vmatpush2.msra.mxu0 0.0
    %1416 = vmatprep.subr.mxu0 0.0
    %1417 = vmatpush2.msra.mxu0 0.0
    %1418 = vmatprep.subr.mxu0 0.0
    %1419 = vmatpush2.msra.mxu0 0.0
    %1420 = vmatprep.subr.mxu0 0.0
    %1421 = vmatpush2.msra.mxu0 0.0
    %1422 = vmatprep.subr.mxu0 0.0
    %1423 = vmatpush2.msra.mxu0 0.0
    %1424 = vmatprep.subr.mxu0 0.0
    %1425 = vmatpush2.msra.mxu0 0.0
    %1426 = vmatprep.subr.mxu0 0.0
    %1427 = vmatpush2.msra.mxu0 0.0
    %1428 = vmatprep.subr.mxu0 0.0
    %1429 = vmatpush2.msra.mxu0 0.0
    %1430 = vmatprep.subr.mxu0 0.0
    %1431 = vmatpush2.msra.mxu0 0.0
    %1432 = vmatprep.subr.mxu0 0.0
    %1433 = vmatpush2.msra.mxu0 0.0
    %1434 = vmatprep.subr.mxu0 0.0
    %1435 = vmatpush2.msra.mxu0 0.0
    %1436 = vmatprep.subr.mxu0 0.0
    %1437 = vmatpush2.msra.mxu0 0.0
    %1438 = vmatprep.subr.mxu0 0.0
    %1439 = vmatpush2.msra.mxu0 0.0
    %1440 = vmatprep.mubr.f32.mxu0 0.0
    %1441 = vmatmul.mubr.f32.gmra.mxu0 %v1365
    %v1442 = vpop.f32.mrf.mxu0
    %v1443 = vadd.f32 1e-10, %v1442
    %v1444 = vpop.f32.mrf.mxu0
    %1445 = vmatprep.mubr.f32.mxu0 0.0
    %1446 = vmatmul.mubr.f32.gmra.mxu0 %v1368
    %v1447 = vpop.f32.mrf.mxu0
    %v1448 = vadd.f32 1e-10, %v1447
    %v1449 = vpop.f32.mrf.mxu0
    %1450 = vmatprep.mubr.f32.mxu0 0.0
    %1451 = vmatmul.mubr.f32.gmra.mxu0 %v1371
    %v1452 = vpop.f32.mrf.mxu0
    %v1453 = vadd.f32 1e-10, %v1452
    %v1454 = vpop.f32.mrf.mxu0
    %1455 = vmatprep.mubr.f32.mxu0 0.0
    %1456 = vmatmul.mubr.f32.gmra.mxu0 %v1374
    %v1457 = vpop.f32.mrf.mxu0
    %v1458 = vadd.f32 1e-10, %v1457
    %v1459 = vpop.f32.mrf.mxu0
    %1460 = vdwg.mxu0
    %v1461 = vmax.f32 %v630, 0.0
    %v1462 = vmax.f32 %v635, 0.0
    %v1463 = vmax.f32 %v640, 0.0
    %v1464 = vmax.f32 %v645, 0.0
    %v1465 = vld [vmem:[%s5] sm:$0xff]
    %v1466 = vld [vmem:[%s5 + $0x8] sm:$0xff]
    %v1467 = vld [vmem:[%s5 + $0x10] sm:$0xff]
    %v1468 = vld [vmem:[%s5 + $0x18] sm:$0xff]
    %v1469 = vld [vmem:[#allocation2] sm:$0x1]
    %v1471 = vlaneseq
    %v1472 = vshrl.u32 %v1471, 7
    %v1473 = vsub.s32 0, %v1472
    %v1474 = vrot.slane %v1469, %v1473
    %vm1476 = vcmask 261120
    %v1478 = vsel %vm1476, %v1461, 0
    %v1481 = vsel %vm1476, %v1462, 0
    %v1484 = vsel %vm1476, %v1463, 0
    %v1487 = vsel %vm1476, %v1464, 0
    %1489 = vmatprep.subr.mxu0 0.0
    %1490 = vmatpush1.msra.mxu0 0.0
    %1491 = vmatprep.subr.mxu0 0.0
    %1492 = vmatpush1.msra.mxu0 0.0
    %1493 = vmatprep.subr.mxu0 0.0
    %1494 = vmatpush1.msra.mxu0 0.0
    %1495 = vmatprep.subr.mxu0 0.0
    %1496 = vmatpush1.msra.mxu0 0.0
    %1497 = vmatprep.subr.mxu0 0.0
    %1498 = vmatpush1.msra.mxu0 0.0
    %1499 = vmatprep.subr.mxu0 0.0
    %1500 = vmatpush1.msra.mxu0 0.0
    %1501 = vmatprep.subr.mxu0 0.0
    %1502 = vmatpush1.msra.mxu0 0.0
    %1503 = vmatprep.subr.mxu0 0.0
    %1504 = vmatpush1.msra.mxu0 0.0
    %1505 = vmatprep.subr.mxu0 0.0
    %1506 = vmatpush1.msra.mxu0 0.0
    %1507 = vmatprep.subr.mxu0 0.0
    %1508 = vmatpush1.msra.mxu0 0.0
    %1509 = vmatprep.subr.mxu0 0.0
    %1510 = vmatpush1.msra.mxu0 0.0
    %1511 = vmatprep.subr.mxu0 0.0
    %1512 = vmatpush1.msra.mxu0 0.0
    %1513 = vmatprep.subr.mxu0 0.0
    %1514 = vmatpush1.msra.mxu0 %v1468
    %1515 = vmatprep.subr.mxu0 0.0
    %1516 = vmatpush1.msra.mxu0 %v1467
    %1517 = vmatprep.subr.mxu0 0.0
    %1518 = vmatpush1.msra.mxu0 %v1466
    %1519 = vmatprep.subr.mxu0 0.0
    %1520 = vmatpush1.msra.mxu0 %v1465
    %1521 = vmatprep.subr.mxu0 0.0
    %1522 = vmatpush2.msra.mxu0 0.0
    %1523 = vmatprep.subr.mxu0 0.0
    %1524 = vmatpush2.msra.mxu0 0.0
    %1525 = vmatprep.subr.mxu0 0.0
    %1526 = vmatpush2.msra.mxu0 0.0
    %1527 = vmatprep.subr.mxu0 0.0
    %1528 = vmatpush2.msra.mxu0 0.0
    %1529 = vmatprep.subr.mxu0 0.0
    %1530 = vmatpush2.msra.mxu0 0.0
    %1531 = vmatprep.subr.mxu0 0.0
    %1532 = vmatpush2.msra.mxu0 0.0
    %1533 = vmatprep.subr.mxu0 0.0
    %1534 = vmatpush2.msra.mxu0 0.0
    %1535 = vmatprep.subr.mxu0 0.0
    %1536 = vmatpush2.msra.mxu0 0.0
    %1537 = vmatprep.subr.mxu0 0.0
    %1538 = vmatpush2.msra.mxu0 0.0
    %1539 = vmatprep.subr.mxu0 0.0
    %1540 = vmatpush2.msra.mxu0 0.0
    %1541 = vmatprep.subr.mxu0 0.0
    %1542 = vmatpush2.msra.mxu0 0.0
    %1543 = vmatprep.subr.mxu0 0.0
    %1544 = vmatpush2.msra.mxu0 0.0
    %1545 = vmatprep.subr.mxu0 0.0
    %1546 = vmatpush2.msra.mxu0 0.0
    %1547 = vmatprep.subr.mxu0 0.0
    %1548 = vmatpush2.msra.mxu0 0.0
    %1549 = vmatprep.subr.mxu0 0.0
    %1550 = vmatpush2.msra.mxu0 0.0
    %1551 = vmatprep.subr.mxu0 0.0
    %1552 = vmatpush2.msra.mxu0 0.0
    %1553 = vmatprep.mubr.f32.mxu0 0.0
    %1554 = vmatmul.mubr.f32.gmra.mxu0 %v1478
    %v1555 = vpop.f32.mrf.mxu0
    %v1556 = vadd.f32 %v1474, %v1555
    %v1557 = vpop.f32.mrf.mxu0
    %1558 = vmatprep.mubr.f32.mxu0 0.0
    %1559 = vmatmul.mubr.f32.gmra.mxu0 %v1481
    %v1560 = vpop.f32.mrf.mxu0
    %v1561 = vadd.f32 %v1474, %v1560
    %v1562 = vpop.f32.mrf.mxu0
    %1563 = vmatprep.mubr.f32.mxu0 0.0
    %1564 = vmatmul.mubr.f32.gmra.mxu0 %v1484
    %v1565 = vpop.f32.mrf.mxu0
    %v1566 = vadd.f32 %v1474, %v1565
    %v1567 = vpop.f32.mrf.mxu0
    %1568 = vmatprep.mubr.f32.mxu0 0.0
    %1569 = vmatmul.mubr.f32.gmra.mxu0 %v1487
    %v1570 = vpop.f32.mrf.mxu0
    %v1571 = vadd.f32 %v1474, %v1570
    %v1572 = vpop.f32.mrf.mxu0
    %1573 = vdwg.mxu0
    %v1574 = vmul.f32 %v1556, 0.25
    %v1575 = vmul.f32 %v1561, 0.25
    %v1576 = vmul.f32 %v1566, 0.25
    %v1577 = vmul.f32 %v1571, 0.25
    %1582 = vrot.lane.b32.xlu0 %v630, 48
    %v1583 = vpop.permute.xlu0 %1582
    %1584 = vrot.lane.b32.xlu0 %v635, 48
    %v1585 = vpop.permute.xlu0 %1584
    %1586 = vrot.lane.b32.xlu0 %v640, 48
    %v1587 = vpop.permute.xlu0 %1586
    %1588 = vrot.lane.b32.xlu0 %v645, 48
    %v1589 = vpop.permute.xlu0 %1588
    %v1594 = vmul.f32 %v1443, %v1583
    %v1595 = vmul.f32 %v1448, %v1585
    %v1596 = vmul.f32 %v1453, %v1587
    %v1597 = vmul.f32 %v1458, %v1589
    %1599 = vset.pattern.permute.xlu0 0
    %1600 = vperm.xlu0 %1599, %v1574
    %v1601 = vpop.permute.xlu0 %1600
    %1604 = vset.pattern.permute.xlu0 0
    %1605 = vperm.xlu0 %1604, %v1575
    %v1606 = vpop.permute.xlu0 %1605
    %1609 = vset.pattern.permute.xlu0 0
    %1610 = vperm.xlu0 %1609, %v1576
    %v1611 = vpop.permute.xlu0 %1610
    %1614 = vset.pattern.permute.xlu0 0
    %1615 = vperm.xlu0 %1614, %v1577
    %v1616 = vpop.permute.xlu0 %1615
    %v1618 = vadd.f32 %v1594, %v1601
    %v1619 = vadd.f32 %v1595, %v1606
    %v1620 = vadd.f32 %v1596, %v1611
    %v1621 = vadd.f32 %v1597, %v1616
    %1622 = vrot.lane.b32.xlu0 %v42, 44
    %v1623 = vpop.permute.xlu0 %1622
    %1624 = vrot.lane.b32.xlu0 %v43, 44
    %v1625 = vpop.permute.xlu0 %1624
    %1626 = vrot.lane.b32.xlu0 %v44, 44
    %v1627 = vpop.permute.xlu0 %1626
    %1628 = vrot.lane.b32.xlu0 %v45, 44
    %v1629 = vpop.permute.xlu0 %1628
    %v1634 = vmul.f32 %v1443, %v1623
    %v1635 = vmul.f32 %v1448, %v1625
    %v1636 = vmul.f32 %v1453, %v1627
    %v1637 = vmul.f32 %v1458, %v1629
    %v1638 = vadd.f32 %v1634, %v1601
    %v1639 = vadd.f32 %v1635, %v1606
    %v1640 = vadd.f32 %v1636, %v1611
    %v1641 = vadd.f32 %v1637, %v1616
    %v1642 = vsub.f32 %v1618, %v1638
    %v1643 = vsub.f32 %v1619, %v1639
    %v1644 = vsub.f32 %v1620, %v1640
    %v1645 = vsub.f32 %v1621, %v1641
    %v1646 = vand.u32 2147483647, %v630
    %v1647 = vand.u32 2147483647, %v635
    %v1648 = vand.u32 2147483647, %v640
    %v1649 = vand.u32 2147483647, %v645
    %v1650 = vadd.f32 %v1646, 1e-10
    %v1651 = vadd.f32 %v1647, 1e-10
    %v1652 = vadd.f32 %v1648, 1e-10
    %v1653 = vadd.f32 %v1649, 1e-10
    %v1654 = vxor.u32 %v630, 2147483648
    %v1655 = vxor.u32 %v635, 2147483648
    %v1656 = vxor.u32 %v640, 2147483648
    %v1657 = vxor.u32 %v645, 2147483648
    %v1658 = vmul.f32 %v1654, 1.442695
    %v1659 = vpow.pop %v1658
    %v1660 = vmul.f32 %v1655, 1.442695
    %v1661 = vpow.pop %v1660
    %v1662 = vmul.f32 %v1656, 1.442695
    %v1663 = vpow.pop %v1662
    %v1664 = vmul.f32 %v1657, 1.442695
    %v1665 = vpow.pop %v1664
    %v1666 = vadd.f32 %v1659, 1.0
    %v1667 = vadd.f32 %v1661, 1.0
    %v1668 = vadd.f32 %v1663, 1.0
    %v1669 = vadd.f32 %v1665, 1.0
    %v1670 = vrcp.pop %v1666
    %v1671 = vmul.f32 1.0, %v1670
    %v1672 = vrcp.pop %v1667
    %v1673 = vmul.f32 1.0, %v1672
    %v1674 = vrcp.pop %v1668
    %v1675 = vmul.f32 1.0, %v1674
    %v1676 = vrcp.pop %v1669
    %v1677 = vmul.f32 1.0, %v1676
    %1682 = vrot.lane.b32.xlu0 %v1671, 112
    %v1683 = vpop.permute.xlu0 %1682
    %1684 = vrot.lane.b32.xlu0 %v1673, 112
    %v1685 = vpop.permute.xlu0 %1684
    %1686 = vrot.lane.b32.xlu0 %v1675, 112
    %v1687 = vpop.permute.xlu0 %1686
    %1688 = vrot.lane.b32.xlu0 %v1677, 112
    %v1689 = vpop.permute.xlu0 %1688
    %v1694 = vmul.f32 %v1650, %v1683
    %v1695 = vmul.f32 %v1651, %v1685
    %v1696 = vmul.f32 %v1652, %v1687
    %v1697 = vmul.f32 %v1653, %v1689
    %1698 = vrot.lane.b32.xlu0 %v1671, 96
    %v1699 = vpop.permute.xlu0 %1698
    %1700 = vrot.lane.b32.xlu0 %v1673, 96
    %v1701 = vpop.permute.xlu0 %1700
    %1702 = vrot.lane.b32.xlu0 %v1675, 96
    %v1703 = vpop.permute.xlu0 %1702
    %1704 = vrot.lane.b32.xlu0 %v1677, 96
    %v1705 = vpop.permute.xlu0 %1704
    %v1710 = vmul.f32 %v1694, %v1699
    %v1711 = vmul.f32 %v1695, %v1701
    %v1712 = vmul.f32 %v1696, %v1703
    %v1713 = vmul.f32 %v1697, %v1705
    %1718 = vrot.lane.b32.xlu0 %v1710, 124
    %v1719 = vpop.permute.xlu0 %1718
    %1720 = vrot.lane.b32.xlu0 %v1711, 124
    %v1721 = vpop.permute.xlu0 %1720
    %1722 = vrot.lane.b32.xlu0 %v1712, 124
    %v1723 = vpop.permute.xlu0 %1722
    %1724 = vrot.lane.b32.xlu0 %v1713, 124
    %v1725 = vpop.permute.xlu0 %1724
    %v1730 = vadd.f32 %v1710, %v1719
    %v1731 = vadd.f32 %v1711, %v1721
    %v1732 = vadd.f32 %v1712, %v1723
    %v1733 = vadd.f32 %v1713, %v1725
    %1734 = vrot.lane.b32.xlu0 %v1710, 120
    %v1735 = vpop.permute.xlu0 %1734
    %1736 = vrot.lane.b32.xlu0 %v1711, 120
    %v1737 = vpop.permute.xlu0 %1736
    %1738 = vrot.lane.b32.xlu0 %v1712, 120
    %v1739 = vpop.permute.xlu0 %1738
    %1740 = vrot.lane.b32.xlu0 %v1713, 120
    %v1741 = vpop.permute.xlu0 %1740
    %v1746 = vadd.f32 %v1730, %v1735
    %v1747 = vadd.f32 %v1731, %v1737
    %v1748 = vadd.f32 %v1732, %v1739
    %v1749 = vadd.f32 %v1733, %v1741
    %1750 = vrot.lane.b32.xlu0 %v1710, 116
    %v1751 = vpop.permute.xlu0 %1750
    %1752 = vrot.lane.b32.xlu0 %v1711, 116
    %v1753 = vpop.permute.xlu0 %1752
    %1754 = vrot.lane.b32.xlu0 %v1712, 116
    %v1755 = vpop.permute.xlu0 %1754
    %1756 = vrot.lane.b32.xlu0 %v1713, 116
    %v1757 = vpop.permute.xlu0 %1756
    %v1762 = vadd.f32 %v1746, %v1751
    %v1763 = vadd.f32 %v1747, %v1753
    %v1764 = vadd.f32 %v1748, %v1755
    %v1765 = vadd.f32 %v1749, %v1757
    %v1766 = vsub.f32 %v1762, 1.0
    %v1767 = vsub.f32 %v1763, 1.0
    %v1768 = vsub.f32 %v1764, 1.0
    %v1769 = vsub.f32 %v1765, 1.0
    %1774 = vrot.lane.b32.xlu0 %v1766, 96
    %v1775 = vpop.permute.xlu0 %1774
    %1776 = vrot.lane.b32.xlu0 %v1767, 96
    %v1777 = vpop.permute.xlu0 %1776
    %1778 = vrot.lane.b32.xlu0 %v1768, 96
    %v1779 = vpop.permute.xlu0 %1778
    %1780 = vrot.lane.b32.xlu0 %v1769, 96
    %v1781 = vpop.permute.xlu0 %1780
    %v1786 = vmul.f32 %v1642, %v1775
    %v1787 = vmul.f32 %v1643, %v1777
    %v1788 = vmul.f32 %v1644, %v1779
    %v1789 = vmul.f32 %v1645, %v1781
    %v1790 = vsel %vm1346, %v1786, 0.0
    %1791 = vadd.xlane.f32.xlu0 %v1790
    %v1792 = vpop.xlane.xlu0 %1791
    %v1793 = vsel %vm1346, %v1787, 0.0
    %1794 = vadd.xlane.f32.xlu0 %v1793
    %v1795 = vpop.xlane.xlu0 %1794
    %v1796 = vsel %vm1346, %v1788, 0.0
    %1797 = vadd.xlane.f32.xlu0 %v1796
    %v1798 = vpop.xlane.xlu0 %1797
    %v1799 = vsel %vm1346, %v1789, 0.0
    %1800 = vadd.xlane.f32.xlu0 %v1799
    %v1801 = vpop.xlane.xlu0 %1800
    %1802 = vset.pattern.permute.xlu0 84
    %1803 = vperm.xlu0 %1802, %v630
    %v1804 = vpop.permute.xlu0 %1803
    %1806 = vset.pattern.permute.xlu0 84
    %1807 = vperm.xlu0 %1806, %v635
    %v1808 = vpop.permute.xlu0 %1807
    %1810 = vset.pattern.permute.xlu0 84
    %1811 = vperm.xlu0 %1810, %v640
    %v1812 = vpop.permute.xlu0 %1811
    %1814 = vset.pattern.permute.xlu0 84
    %1815 = vperm.xlu0 %1814, %v645
    %v1816 = vpop.permute.xlu0 %1815
    %v1818 = vsub.f32 %v630, %v1804
    %v1819 = vsub.f32 %v635, %v1808
    %v1820 = vsub.f32 %v640, %v1812
    %v1821 = vsub.f32 %v645, %v1816
    %v1822 = vadd.f32 %v1818, %v1792
    %v1823 = vadd.f32 %v1819, %v1795
    %v1824 = vadd.f32 %v1820, %v1798
    %v1825 = vadd.f32 %v1821, %v1801
    %1830 = vrot.lane.b32.xlu0 %v1822, 43
    %v1831 = vpop.permute.xlu0 %1830
    %1832 = vrot.lane.b32.xlu0 %v1823, 43
    %v1833 = vpop.permute.xlu0 %1832
    %1834 = vrot.lane.b32.xlu0 %v1824, 43
    %v1835 = vpop.permute.xlu0 %1834
    %1836 = vrot.lane.b32.xlu0 %v1825, 43
    %v1837 = vpop.permute.xlu0 %1836
    %1846 = vrot.lane.b32.xlu0 %v1306, 8
    %v1847 = vpop.permute.xlu0 %1846
    %1848 = vrot.lane.b32.xlu0 %v1307, 8
    %v1849 = vpop.permute.xlu0 %1848
    %1850 = vrot.lane.b32.xlu0 %v1308, 8
    %v1851 = vpop.permute.xlu0 %1850
    %1852 = vrot.lane.b32.xlu0 %v1309, 8
    %v1853 = vpop.permute.xlu0 %1852
    %1862 = vrot.lane.b32.xlu0 %v1342, 12
    %v1863 = vpop.permute.xlu0 %1862
    %1864 = vrot.lane.b32.xlu0 %v1343, 12
    %v1865 = vpop.permute.xlu0 %1864
    %1866 = vrot.lane.b32.xlu0 %v1344, 12
    %v1867 = vpop.permute.xlu0 %1866
    %1868 = vrot.lane.b32.xlu0 %v1345, 12
    %v1869 = vpop.permute.xlu0 %1868
    %v1874 = vsel %vm1351, %v1831, %v1847
    %v1875 = vsel %vm1351, %v1833, %v1849
    %v1876 = vsel %vm1351, %v1835, %v1851
    %v1877 = vsel %vm1351, %v1837, %v1853
    %v1878 = vsel %vm1356, %v1874, %v1863
    %v1879 = vsel %vm1356, %v1875, %v1865
    %v1880 = vsel %vm1356, %v1876, %v1867
    %v1881 = vsel %vm1356, %v1877, %v1869
    %1882 = vst.msk [vmem:[%s7] sm:$0xff] %vm1363, %v1878
    %1883 = vst.msk [vmem:[%s7 + $0x8] sm:$0xff] %vm1363, %v1879
    %1884 = vst.msk [vmem:[%s7 + $0x10] sm:$0xff] %vm1363, %v1880
    %1885 = vst.msk [vmem:[%s7 + $0x18] sm:$0xff] %vm1363, %v1881
    // Predicated region
    $region34: #{tpu_custom_call.1} parent=1 // pred_check
      _
    $region35: #{tpu_custom_call.1} parent=1 // pred_check_branch
      %1887 = sbr.rel (0) target = $region37
    $region36: #{tpu_custom_call.1} parent=1 // pred_region
      _
    $region37: #{tpu_custom_call.1} parent=1 // pred_fallthru
      _
    // Predicated region
    $region38: #{tpu_custom_call.1} parent=1 // pred_check
      _
    $region39: #{tpu_custom_call.1} parent=1 // pred_check_branch
      %1889 = sbr.rel (0) target = $region41
    $region40: #{tpu_custom_call.1} parent=1 // pred_region
      _
    $region41: #{tpu_custom_call.1} parent=1 // pred_fallthru
      _
    %1890 = vsyncpa [#allocation4], 1

</llo_original>
